<compile_context>
chip_gen: v7x
topology: tpu7x:2x2x1
jax: 0.10.0
libtpu: 0.0.40
codegen_flags: <defaults>
</compile_context>

<pallas_src>
import jax
import jax.numpy as jnp
from jax.experimental import pallas as pl
from jax.experimental.pallas import tpu as pltpu

LAYER1_SIZE = 192
NUM_RNN_LAYER = 1
OUT_PUT_SIZE = 256
HIDDEN = OUT_PUT_SIZE
ACT_PAD = 128   # lane-dense padded width of the output head


def actor_kernel(x_ref, h0_ref, c0_ref,
                 wa_ref, ba_ref, wb_ref, bb_ref,
                 wl_ref, bl_ref, wo_ref, bo_ref,
                 act_ref, h1_ref, c1_ref):
    f32 = jnp.float32
    bf16 = jnp.bfloat16
    H = HIDDEN

    # Branch layer 1: block-diag(conv1, conv3) weights, (24 -> 128), + relu.
    a = jnp.dot(x_ref[...].astype(bf16), wa_ref[...], preferred_element_type=f32)
    a = jnp.maximum(a + ba_ref[...], 0.0)

    # Branch layer 2: block-diag(conv2, conv4) weights, (128 -> 256), + relu.
    # Equivalent to cat(relu(conv2(.)), relu(conv4(.)), dim=channel).
    z = jnp.dot(a.astype(bf16), wb_ref[...], preferred_element_type=f32)
    z = jnp.maximum(z + bb_ref[...], 0.0)

    # Fused single-step LSTM cell: [z, h0] @ [wih; whh] + (bih + bhh).
    # Gate column order is (i, f, o, g) after the param-prep permutation.
    zh = jnp.concatenate([z, h0_ref[...]], axis=-1).astype(bf16)        # (TB, 512)
    gates = jnp.dot(zh, wl_ref[...], preferred_element_type=f32) + bl_ref[...]
    sig = jax.nn.sigmoid(gates[:, :3 * H])
    g_g = jnp.tanh(gates[:, 3 * H:])
    i_g = sig[:, 0 * H:1 * H]
    f_g = sig[:, 1 * H:2 * H]
    o_g = sig[:, 2 * H:3 * H]
    c1 = f_g * c0_ref[...] + i_g * g_g
    h1 = o_g * jnp.tanh(c1)

    # Output head (256 -> ACT_PAD); columns beyond action_dim are zero-padded.
    act_ref[...] = (jnp.dot(h1.astype(bf16), wo_ref[...],
                            preferred_element_type=f32) + bo_ref[...])
    h1_ref[...] = h1
    c1_ref[...] = c1


def actor_forward(fused, state_agent, state_rider, hidden_cm, action_dim):
    """Mirrors ActorNet.forward(state_agent, state_rider, hidden_cm)."""
    B = state_agent.shape[0]
    assert state_agent.shape[2] <= LAYER1_SIZE and state_agent.shape[3] <= LAYER1_SIZE
    assert state_rider.shape[2] <= LAYER1_SIZE and state_rider.shape[3] <= LAYER1_SIZE

    # kernel_size=1 / stride=192 conv with spatial < 192 samples only pixel (0,0).
    xa = state_agent[:, :, 0, 0].astype(jnp.float32)    # (B, 14)
    xr = state_rider[:, :, 0, 0].astype(jnp.float32)    # (B, 10)
    x = jnp.concatenate([xa, xr], axis=-1)              # (B, 24)

    h0, c0 = hidden_cm                                   # (1, B, 256) each
    h0 = h0.reshape(B, HIDDEN).astype(jnp.float32)
    c0 = c0.reshape(B, HIDDEN).astype(jnp.float32)

    # Pad batch to a sublane-aligned tile; tile the batch across the grid.
    B8 = ((B + 7) // 8) * 8
    TB = min(B8, 256)
    B_pad = ((B8 + TB - 1) // TB) * TB
    if B_pad != B:
        pad = ((0, B_pad - B), (0, 0))
        x = jnp.pad(x, pad)
        h0 = jnp.pad(h0, pad)
        c0 = jnp.pad(c0, pad)

    def batch_spec(n):
        return pl.BlockSpec((TB, n), lambda i: (i, 0))

    def full_spec(m, n):
        return pl.BlockSpec((m, n), lambda i: (0, 0))

    act, h1, c1 = pl.pallas_call(
        actor_kernel,
        out_shape=(jax.ShapeDtypeStruct((B_pad, ACT_PAD), jnp.float32),
                   jax.ShapeDtypeStruct((B_pad, HIDDEN), jnp.float32),
                   jax.ShapeDtypeStruct((B_pad, HIDDEN), jnp.float32)),
        grid_spec=pltpu.PrefetchScalarGridSpec(
            num_scalar_prefetch=0,
            grid=(B_pad // TB,),
            in_specs=[batch_spec(24), batch_spec(HIDDEN), batch_spec(HIDDEN),
                      full_spec(24, 128), full_spec(1, 128),
                      full_spec(128, 256), full_spec(1, 256),
                      full_spec(2 * HIDDEN, 4 * HIDDEN), full_spec(1, 4 * HIDDEN),
                      full_spec(HIDDEN, ACT_PAD), full_spec(1, ACT_PAD)],
            out_specs=(batch_spec(ACT_PAD), batch_spec(HIDDEN), batch_spec(HIDDEN))),
        compiler_params=pltpu.CompilerParams(dimension_semantics=("parallel",)),
    )(x, h0, c0,
      fused["wa"], fused["ba"], fused["wb"], fused["bb"],
      fused["wl"], fused["bl"], fused["wo"], fused["bo"])

    actions_value = act[:B, :action_dim].reshape(B, 1, action_dim)
    new_hidden = (h1[:B].reshape(NUM_RNN_LAYER, B, HIDDEN),
                  c1[:B].reshape(NUM_RNN_LAYER, B, HIDDEN))
    return actions_value, new_hidden


def init_params(key, action_dim):
    """Deterministic synthetic params in PyTorch-equivalent layout (f32)."""
    ks = jax.random.split(key, 14)

    def n(k, shape, scale):
        return (scale * jax.random.normal(k, shape)).astype(jnp.float32)

    return dict(
        # conv weights stored transposed as (C_in, C_out) for x @ W
        w1=n(ks[0], (14, 64), 0.1),    b1=n(ks[1], (1, 64), 0.05),
        w2=n(ks[2], (64, 128), 0.1),   b2=n(ks[3], (1, 128), 0.05),
        w3=n(ks[4], (10, 64), 0.1),    b3=n(ks[5], (1, 64), 0.05),
        w4=n(ks[6], (64, 128), 0.1),   b4=n(ks[7], (1, 128), 0.05),
        # LSTM: weight_ih/hh transposed to (in, 4*hidden); gate blocks i,f,g,o
        wih=n(ks[8], (256, 4 * HIDDEN), 0.05),     bih=n(ks[9], (1, 4 * HIDDEN), 0.05),
        whh=n(ks[10], (HIDDEN, 4 * HIDDEN), 0.05), bhh=n(ks[11], (1, 4 * HIDDEN), 0.05),
        # output linear (256 -> action_dim)
        wo=n(ks[12], (HIDDEN, action_dim), 0.05),  bo=n(ks[13], (1, action_dim), 0.05),
    )


def _block_diag(w_tl, w_br):
    r1, c1 = w_tl.shape
    r2, c2 = w_br.shape
    top = jnp.concatenate([w_tl, jnp.zeros((r1, c2), w_tl.dtype)], axis=1)
    bot = jnp.concatenate([jnp.zeros((r2, c1), w_br.dtype), w_br], axis=1)
    return jnp.concatenate([top, bot], axis=0)


def _reorder_ifgo_to_ifog(w):
    i, f, g, o = jnp.split(w, 4, axis=-1)
    return jnp.concatenate([i, f, o, g], axis=-1)


def fuse_params(p, action_dim):
    """One-time param prep: block-diag branch fusion, stacked LSTM weights,
    gate reorder (i,f,g,o)->(i,f,o,g), padded output head, bf16 weights."""
    bf16 = jnp.bfloat16
    wa = _block_diag(p["w1"], p["w3"])                                  # (24, 128)
    ba = jnp.concatenate([p["b1"], p["b3"]], axis=-1)                   # (1, 128)
    wb = _block_diag(p["w2"], p["w4"])                                  # (128, 256)
    bb = jnp.concatenate([p["b2"], p["b4"]], axis=-1)                   # (1, 256)
    wl = jnp.concatenate([_reorder_ifgo_to_ifog(p["wih"]),
                          _reorder_ifgo_to_ifog(p["whh"])], axis=0)     # (512, 1024)
    bl = _reorder_ifgo_to_ifog(p["bih"] + p["bhh"])                     # (1, 1024)
    wo = jnp.zeros((HIDDEN, ACT_PAD), jnp.float32).at[:, :action_dim].set(p["wo"])
    bo = jnp.zeros((1, ACT_PAD), jnp.float32).at[:, :action_dim].set(p["bo"])
    return dict(
        wa=wa.astype(bf16), ba=ba,          # biases stay f32 (tiny, added post-acc)
        wb=wb.astype(bf16), bb=bb,
        wl=wl.astype(bf16), bl=bl,
        wo=wo.astype(bf16), bo=bo,
    )


if __name__ == "__main__":
    key = jax.random.PRNGKey(0)
    kp, ka, kr, kh, kc = jax.random.split(key, 5)

    B, action_dim = 2, 8
    raw_params = init_params(kp, action_dim)
    fused_params = fuse_params(raw_params, action_dim)

    state_agent = jax.random.normal(ka, (B, 14, 16, 16), dtype=jnp.float32)
    state_rider = jax.random.normal(kr, (B, 10, 16, 16), dtype=jnp.float32)
    h0 = jax.random.normal(kh, (NUM_RNN_LAYER, B, HIDDEN), dtype=jnp.float32)
    c0 = jax.random.normal(kc, (NUM_RNN_LAYER, B, HIDDEN), dtype=jnp.float32)

    actions_value, (h1, c1) = actor_forward(
        fused_params, state_agent, state_rider, (h0, c0), action_dim)
    jax.block_until_ready((actions_value, h1, c1))

    assert actions_value.shape == (B, 1, action_dim)
    assert h1.shape == (NUM_RNN_LAYER, B, HIDDEN) and c1.shape == (NUM_RNN_LAYER, B, HIDDEN)
    print("KERNEL_OK")
</pallas_src>

<mosaic_0001>
module attributes {stable_mosaic.version = 11 : i64} {
  func.func @actor_kernel(%arg0: i32, %arg1: memref<8x24xf32, #tpu.memory_space<vmem>>, %arg2: memref<8x256xf32, #tpu.memory_space<vmem>>, %arg3: memref<8x256xf32, #tpu.memory_space<vmem>>, %arg4: memref<24x128xbf16, #tpu.memory_space<vmem>>, %arg5: memref<1x128xf32, #tpu.memory_space<vmem>>, %arg6: memref<128x256xbf16, #tpu.memory_space<vmem>>, %arg7: memref<1x256xf32, #tpu.memory_space<vmem>>, %arg8: memref<512x1024xbf16, #tpu.memory_space<vmem>>, %arg9: memref<1x1024xf32, #tpu.memory_space<vmem>>, %arg10: memref<256x128xbf16, #tpu.memory_space<vmem>>, %arg11: memref<1x128xf32, #tpu.memory_space<vmem>>, %arg12: memref<8x128xf32, #tpu.memory_space<vmem>>, %arg13: memref<8x256xf32, #tpu.memory_space<vmem>>, %arg14: memref<8x256xf32, #tpu.memory_space<vmem>>) attributes {dimension_semantics = [#tpu.dimension_semantics<parallel>], iteration_bounds = array<i64: 1>, scalar_prefetch = 0 : i64, scratch_operands = 0 : i64, tpu.core_type = #tpu.core_type<tc>, window_params = [{transform_indices = @transform_0, window_bounds = array<i64: 8, 24>}, {transform_indices = @transform_1, window_bounds = array<i64: 8, 256>}, {transform_indices = @transform_2, window_bounds = array<i64: 8, 256>}, {pipeline_mode = #tpu.pipeline_mode<synchronous>, transform_indices = @transform_3, window_bounds = array<i64: 24, 128>}, {pipeline_mode = #tpu.pipeline_mode<synchronous>, transform_indices = @transform_4, window_bounds = array<i64: 1, 128>}, {pipeline_mode = #tpu.pipeline_mode<synchronous>, transform_indices = @transform_5, window_bounds = array<i64: 128, 256>}, {pipeline_mode = #tpu.pipeline_mode<synchronous>, transform_indices = @transform_6, window_bounds = array<i64: 1, 256>}, {pipeline_mode = #tpu.pipeline_mode<synchronous>, transform_indices = @transform_7, window_bounds = array<i64: 512, 1024>}, {pipeline_mode = #tpu.pipeline_mode<synchronous>, transform_indices = @transform_8, window_bounds = array<i64: 1, 1024>}, {pipeline_mode = #tpu.pipeline_mode<synchronous>, transform_indices = @transform_9, window_bounds = array<i64: 256, 128>}, {pipeline_mode = #tpu.pipeline_mode<synchronous>, transform_indices = @transform_10, window_bounds = array<i64: 1, 128>}, {transform_indices = @transform_11, window_bounds = array<i64: 8, 128>}, {transform_indices = @transform_12, window_bounds = array<i64: 8, 256>}, {transform_indices = @transform_13, window_bounds = array<i64: 8, 256>}]} {
    %c0 = arith.constant 0 : index
    %c0_0 = arith.constant 0 : index
    %0 = vector.load %arg1[%c0, %c0_0] : memref<8x24xf32, #tpu.memory_space<vmem>>, vector<8x24xf32>
    %1 = arith.truncf %0 : vector<8x24xf32> to vector<8x24xbf16>
    %c0_1 = arith.constant 0 : index
    %c0_2 = arith.constant 0 : index
    %2 = vector.load %arg4[%c0_1, %c0_2] : memref<24x128xbf16, #tpu.memory_space<vmem>>, vector<24x128xbf16>
    %cst = arith.constant dense<0.000000e+00> : vector<8x128xf32>
    %3 = tpu.matmul %1, %2, %cst {dimension_numbers = #tpu.dot_dimension_numbers<[1], [0], [0], [1], [0, 0, 1, 1], [], []>} : vector<8x24xbf16>, vector<24x128xbf16>, vector<8x128xf32> -> vector<8x128xf32>
    %c0_3 = arith.constant 0 : index
    %c0_4 = arith.constant 0 : index
    %4 = vector.load %arg5[%c0_3, %c0_4] : memref<1x128xf32, #tpu.memory_space<vmem>>, vector<1x128xf32>
    %5 = vector.broadcast %4 : vector<1x128xf32> to vector<8x128xf32>
    %6 = arith.addf %3, %5 : vector<8x128xf32>
    %cst_5 = arith.constant 0.000000e+00 : f32
    %7 = vector.broadcast %cst_5 : f32 to vector<8x128xf32>
    %8 = arith.maximumf %6, %7 : vector<8x128xf32>
    %9 = arith.truncf %8 : vector<8x128xf32> to vector<8x128xbf16>
    %c0_6 = arith.constant 0 : index
    %c0_7 = arith.constant 0 : index
    %10 = vector.load %arg6[%c0_6, %c0_7] : memref<128x256xbf16, #tpu.memory_space<vmem>>, vector<128x256xbf16>
    %cst_8 = arith.constant dense<0.000000e+00> : vector<8x256xf32>
    %11 = tpu.matmul %9, %10, %cst_8 {dimension_numbers = #tpu.dot_dimension_numbers<[1], [0], [0], [1], [0, 0, 1, 1], [], []>} : vector<8x128xbf16>, vector<128x256xbf16>, vector<8x256xf32> -> vector<8x256xf32>
    %c0_9 = arith.constant 0 : index
    %c0_10 = arith.constant 0 : index
    %12 = vector.load %arg7[%c0_9, %c0_10] : memref<1x256xf32, #tpu.memory_space<vmem>>, vector<1x256xf32>
    %13 = vector.broadcast %12 : vector<1x256xf32> to vector<8x256xf32>
    %14 = arith.addf %11, %13 : vector<8x256xf32>
    %cst_11 = arith.constant 0.000000e+00 : f32
    %15 = vector.broadcast %cst_11 : f32 to vector<8x256xf32>
    %16 = arith.maximumf %14, %15 : vector<8x256xf32>
    %c0_12 = arith.constant 0 : index
    %c0_13 = arith.constant 0 : index
    %17 = vector.load %arg2[%c0_12, %c0_13] : memref<8x256xf32, #tpu.memory_space<vmem>>, vector<8x256xf32>
    %18 = tpu.concatenate %16, %17 in 1 : vector<8x256xf32>, vector<8x256xf32> -> vector<8x512xf32>
    %19 = arith.truncf %18 : vector<8x512xf32> to vector<8x512xbf16>
    %c0_14 = arith.constant 0 : index
    %c0_15 = arith.constant 0 : index
    %20 = vector.load %arg8[%c0_14, %c0_15] : memref<512x1024xbf16, #tpu.memory_space<vmem>>, vector<512x1024xbf16>
    %cst_16 = arith.constant dense<0.000000e+00> : vector<8x1024xf32>
    %21 = tpu.matmul %19, %20, %cst_16 {dimension_numbers = #tpu.dot_dimension_numbers<[1], [0], [0], [1], [0, 0, 1, 1], [], []>} : vector<8x512xbf16>, vector<512x1024xbf16>, vector<8x1024xf32> -> vector<8x1024xf32>
    %c0_17 = arith.constant 0 : index
    %c0_18 = arith.constant 0 : index
    %22 = vector.load %arg9[%c0_17, %c0_18] : memref<1x1024xf32, #tpu.memory_space<vmem>>, vector<1x1024xf32>
    %23 = vector.broadcast %22 : vector<1x1024xf32> to vector<8x1024xf32>
    %24 = arith.addf %21, %23 : vector<8x1024xf32>
    %25 = vector.extract_strided_slice %24 {offsets = [0, 0], sizes = [8, 768], strides = [1, 1]} : vector<8x1024xf32> to vector<8x768xf32>
    %26 = arith.negf %25 : vector<8x768xf32>
    %27 = math.exp %26 : vector<8x768xf32>
    %cst_19 = arith.constant 1.000000e+00 : f32
    %28 = vector.broadcast %cst_19 : f32 to vector<8x768xf32>
    %29 = arith.addf %28, %27 : vector<8x768xf32>
    %30 = arith.divf %28, %29 : vector<8x768xf32>
    %31 = vector.extract_strided_slice %24 {offsets = [0, 768], sizes = [8, 256], strides = [1, 1]} : vector<8x1024xf32> to vector<8x256xf32>
    %32 = math.tanh %31 : vector<8x256xf32>
    %33 = vector.extract_strided_slice %30 {offsets = [0, 0], sizes = [8, 256], strides = [1, 1]} : vector<8x768xf32> to vector<8x256xf32>
    %34 = vector.extract_strided_slice %30 {offsets = [0, 256], sizes = [8, 256], strides = [1, 1]} : vector<8x768xf32> to vector<8x256xf32>
    %35 = vector.extract_strided_slice %30 {offsets = [0, 512], sizes = [8, 256], strides = [1, 1]} : vector<8x768xf32> to vector<8x256xf32>
    %c0_20 = arith.constant 0 : index
    %c0_21 = arith.constant 0 : index
    %36 = vector.load %arg3[%c0_20, %c0_21] : memref<8x256xf32, #tpu.memory_space<vmem>>, vector<8x256xf32>
    %37 = arith.mulf %34, %36 : vector<8x256xf32>
    %38 = arith.mulf %33, %32 : vector<8x256xf32>
    %39 = arith.addf %37, %38 : vector<8x256xf32>
    %40 = math.tanh %39 : vector<8x256xf32>
    %41 = arith.mulf %35, %40 : vector<8x256xf32>
    %42 = arith.truncf %41 : vector<8x256xf32> to vector<8x256xbf16>
    %c0_22 = arith.constant 0 : index
    %c0_23 = arith.constant 0 : index
    %43 = vector.load %arg10[%c0_22, %c0_23] : memref<256x128xbf16, #tpu.memory_space<vmem>>, vector<256x128xbf16>
    %cst_24 = arith.constant dense<0.000000e+00> : vector<8x128xf32>
    %44 = tpu.matmul %42, %43, %cst_24 {dimension_numbers = #tpu.dot_dimension_numbers<[1], [0], [0], [1], [0, 0, 1, 1], [], []>} : vector<8x256xbf16>, vector<256x128xbf16>, vector<8x128xf32> -> vector<8x128xf32>
    %c0_25 = arith.constant 0 : index
    %c0_26 = arith.constant 0 : index
    %45 = vector.load %arg11[%c0_25, %c0_26] : memref<1x128xf32, #tpu.memory_space<vmem>>, vector<1x128xf32>
    %46 = vector.broadcast %45 : vector<1x128xf32> to vector<8x128xf32>
    %47 = arith.addf %44, %46 : vector<8x128xf32>
    %c0_27 = arith.constant 0 : index
    %c0_28 = arith.constant 0 : index
    %48 = vector.load %arg12[%c0_27, %c0_28] : memref<8x128xf32, #tpu.memory_space<vmem>>, vector<8x128xf32>
    tpu.vector_store %arg12[%c0_27, %c0_28], %47 {strides = array<i32>} : memref<8x128xf32, #tpu.memory_space<vmem>>, vector<8x128xf32>,
    %c0_29 = arith.constant 0 : index
    %c0_30 = arith.constant 0 : index
    %49 = vector.load %arg13[%c0_29, %c0_30] : memref<8x256xf32, #tpu.memory_space<vmem>>, vector<8x256xf32>
    tpu.vector_store %arg13[%c0_29, %c0_30], %41 {strides = array<i32>} : memref<8x256xf32, #tpu.memory_space<vmem>>, vector<8x256xf32>,
    %c0_31 = arith.constant 0 : index
    %c0_32 = arith.constant 0 : index
    %50 = vector.load %arg14[%c0_31, %c0_32] : memref<8x256xf32, #tpu.memory_space<vmem>>, vector<8x256xf32>
    tpu.vector_store %arg14[%c0_31, %c0_32], %39 {strides = array<i32>} : memref<8x256xf32, #tpu.memory_space<vmem>>, vector<8x256xf32>,
    return
  }
  func.func @transform_0(%arg0: i32) -> (i32, i32) {
    %c0_i32 = arith.constant 0 : i32
    %c0_i32_0 = arith.constant 0 : i32
    return %arg0, %c0_i32 : i32, i32
  }
  func.func @transform_1(%arg0: i32) -> (i32, i32) {
    %c0_i32 = arith.constant 0 : i32
    %c0_i32_0 = arith.constant 0 : i32
    return %arg0, %c0_i32 : i32, i32
  }
  func.func @transform_2(%arg0: i32) -> (i32, i32) {
    %c0_i32 = arith.constant 0 : i32
    %c0_i32_0 = arith.constant 0 : i32
    return %arg0, %c0_i32 : i32, i32
  }
  func.func @transform_3(%arg0: i32) -> (i32, i32) {
    %c0_i32 = arith.constant 0 : i32
    %c0_i32_0 = arith.constant 0 : i32
    %c0_i32_1 = arith.constant 0 : i32
    return %c0_i32, %c0_i32_0 : i32, i32
  }
  func.func @transform_4(%arg0: i32) -> (i32, i32) {
    %c0_i32 = arith.constant 0 : i32
    %c0_i32_0 = arith.constant 0 : i32
    %c0_i32_1 = arith.constant 0 : i32
    return %c0_i32, %c0_i32_0 : i32, i32
  }
  func.func @transform_5(%arg0: i32) -> (i32, i32) {
    %c0_i32 = arith.constant 0 : i32
    %c0_i32_0 = arith.constant 0 : i32
    %c0_i32_1 = arith.constant 0 : i32
    return %c0_i32, %c0_i32_0 : i32, i32
  }
  func.func @transform_6(%arg0: i32) -> (i32, i32) {
    %c0_i32 = arith.constant 0 : i32
    %c0_i32_0 = arith.constant 0 : i32
    %c0_i32_1 = arith.constant 0 : i32
    return %c0_i32, %c0_i32_0 : i32, i32
  }
  func.func @transform_7(%arg0: i32) -> (i32, i32) {
    %c0_i32 = arith.constant 0 : i32
    %c0_i32_0 = arith.constant 0 : i32
    %c0_i32_1 = arith.constant 0 : i32
    return %c0_i32, %c0_i32_0 : i32, i32
  }
  func.func @transform_8(%arg0: i32) -> (i32, i32) {
    %c0_i32 = arith.constant 0 : i32
    %c0_i32_0 = arith.constant 0 : i32
    %c0_i32_1 = arith.constant 0 : i32
    return %c0_i32, %c0_i32_0 : i32, i32
  }
  func.func @transform_9(%arg0: i32) -> (i32, i32) {
    %c0_i32 = arith.constant 0 : i32
    %c0_i32_0 = arith.constant 0 : i32
    %c0_i32_1 = arith.constant 0 : i32
    return %c0_i32, %c0_i32_0 : i32, i32
  }
  func.func @transform_10(%arg0: i32) -> (i32, i32) {
    %c0_i32 = arith.constant 0 : i32
    %c0_i32_0 = arith.constant 0 : i32
    %c0_i32_1 = arith.constant 0 : i32
    return %c0_i32, %c0_i32_0 : i32, i32
  }
  func.func @transform_11(%arg0: i32) -> (i32, i32) {
    %c0_i32 = arith.constant 0 : i32
    %c0_i32_0 = arith.constant 0 : i32
    return %arg0, %c0_i32 : i32, i32
  }
  func.func @transform_12(%arg0: i32) -> (i32, i32) {
    %c0_i32 = arith.constant 0 : i32
    %c0_i32_0 = arith.constant 0 : i32
    return %arg0, %c0_i32 : i32, i32
  }
  func.func @transform_13(%arg0: i32) -> (i32, i32) {
    %c0_i32 = arith.constant 0 : i32
    %c0_i32_0 = arith.constant 0 : i32
    return %arg0, %c0_i32 : i32, i32
  }
}

</mosaic_0001>

<llo_original>
// kernel: tpu_custom_call.1
$region0: #{tpu_custom_call.1}
  #allocation0 [shape = 'u32[]', space=smem, size = 0x4, offset = 0x4, fixed_abs, tag = 'smem constant byte address 0x4 - core index']
  #allocation1 [shape = 'u32[144,128]{1,0:T(1,128)}', space=vmem, size = 0x12000, scoped, tag = 'internal scratch']
  %s0 = inlined_call_operand.hbm [shape: f32[8,24], index: 0, kind: input, shape index: {}]
  %s1 = inlined_call_operand.hbm [shape: f32[8,256], index: 1, kind: input, shape index: {}]
  %s2 = inlined_call_operand.hbm [shape: f32[8,256], index: 2, kind: input, shape index: {}]
  %s3 = inlined_call_operand.hbm [shape: bf16[24,128], index: 3, kind: input, shape index: {}]
  %s4 = inlined_call_operand.vmem [shape: f32[1,128], index: 4, kind: input, shape index: {}]
  %s5 = inlined_call_operand.hbm [shape: bf16[128,256], index: 5, kind: input, shape index: {}]
  %s6 = inlined_call_operand.vmem [shape: f32[1,256], index: 6, kind: input, shape index: {}]
  %s7 = inlined_call_operand.hbm [shape: bf16[512,1024], index: 7, kind: input, shape index: {}]
  %s8 = inlined_call_operand.vmem [shape: f32[1,1024], index: 8, kind: input, shape index: {}]
  %s9 = inlined_call_operand.hbm [shape: bf16[256,128], index: 9, kind: input, shape index: {}]
  %s10 = inlined_call_operand.vmem [shape: f32[1,128], index: 10, kind: input, shape index: {}]
  %s11 = inlined_call_operand.hbm [shape: f32[8,128], index: 11, kind: output, shape index: {0}]
  %s12 = inlined_call_operand.hbm [shape: f32[8,256], index: 12, kind: output, shape index: {1}]
  %s13 = inlined_call_operand.hbm [shape: f32[8,256], index: 13, kind: output, shape index: {2}]
  %14 = xla_tuple %s11, %s12, %s13
  %s15 = sld [smem:[#allocation0]]
  $region98: #{tpu_custom_call.1} parent=0
    _
  %s17 = ssub.s32 1, %s15
  %s18 = scalar_select 0, %s17, %s15
  $region1: #{tpu_custom_call.1} parent=0
    #allocation2 [shape = 'u8[4096]{0}', space=vmem, size = 0x1000, scoped, tag = 'input window, operand 0, single buffered']
    #allocation3 [shape = 's32[1]{0}', space=sflag, size = 0x4, scoped, tag = 'scoped memory for tpu_custom_call.1']
    #allocation4 [shape = 's32[1]{0}', space=sflag, size = 0x4, scoped, tag = 'scoped memory for tpu_custom_call.1']
    #allocation5 [shape = 'u8[8192]{0}', space=vmem, size = 0x2000, scoped, tag = 'input window, operand 1, single buffered']
    #allocation6 [shape = 's32[1]{0}', space=sflag, size = 0x4, scoped, tag = 'scoped memory for tpu_custom_call.1']
    #allocation7 [shape = 'u8[8192]{0}', space=vmem, size = 0x2000, scoped, tag = 'input window, operand 2, single buffered']
    #allocation8 [shape = 'u8[6144]{0}', space=vmem, size = 0x1800, scoped, tag = 'input window, operand 3, single buffered']
    #allocation9 [shape = 's32[1]{0}', space=sflag, size = 0x4, scoped, tag = 'scoped memory for tpu_custom_call.1']
    #allocation10 [shape = 'u8[65536]{0}', space=vmem, size = 0x10000, scoped, tag = 'input window, operand 5, single buffered']
    #allocation11 [shape = 'u8[1048576]{0}', space=vmem, size = 0x100000, scoped, tag = 'input window, operand 7, single buffered']
    #allocation12 [shape = 's32[1]{0}', space=sflag, size = 0x4, scoped, tag = 'scoped memory for tpu_custom_call.1']
    #allocation13 [shape = 'u8[65536]{0}', space=vmem, size = 0x10000, scoped, tag = 'input window, operand 9, single buffered']
    #allocation14 [shape = 'u8[4096]{0}', space=vmem, size = 0x1000, scoped, tag = 'output window, operand 0, single buffered']
    #allocation15 [shape = 'u8[8192]{0}', space=vmem, size = 0x2000, scoped, tag = 'output window, operand 1, single buffered']
    #allocation16 [shape = 's32[1]{0}', space=sflag, size = 0x4, scoped, tag = 'scoped memory for tpu_custom_call.1']
    #allocation17 [shape = 'u8[8192]{0}', space=vmem, size = 0x2000, scoped, tag = 'output window, operand 2, single buffered']
    %19 = vsyncpa [#allocation3], 0
    %20 = vsyncpa [#allocation6], 0
    %21 = vsyncpa [#allocation9], 0
    %22 = vsyncpa [#allocation12], 0
    %23 = vsyncpa [#allocation4], 0
    %24 = vsyncpa [#allocation16], 0
    // Predicated region
    $region2: #{tpu_custom_call.1} parent=1 // pred_check
      _
    $region3: #{tpu_custom_call.1} parent=1 // pred_check_branch
      %26 = sbr.rel (0) target = $region5
    $region4: #{tpu_custom_call.1} parent=1 // pred_region
      %s28 = ssub.s32 128, 128
      %29 = vsyncadd [#allocation3], %s28
      %s31 = sshll.u32 [#allocation2], 4
      %s32 = int_to_ptr.vmem [resolvable:$true] %s31
      %34 = dma.hbm_to_vmem [thread:$0]  %s0, 128, %s32, [#allocation3]
    $region5: #{tpu_custom_call.1} parent=1 // pred_fallthru
      _
    // Predicated region
    $region6: #{tpu_custom_call.1} parent=1 // pred_check
      _
    $region7: #{tpu_custom_call.1} parent=1 // pred_check_branch
      %36 = sbr.rel (0) target = $region9
    $region8: #{tpu_custom_call.1} parent=1 // pred_region
      %s38 = ssub.s32 256, 256
      %39 = vsyncadd [#allocation6], %s38
      %s41 = sshll.u32 [#allocation5], 4
      %s42 = int_to_ptr.vmem [resolvable:$true] %s41
      %44 = dma.hbm_to_vmem [thread:$0]  %s1, 256, %s42, [#allocation6]
    $region9: #{tpu_custom_call.1} parent=1 // pred_fallthru
      _
    // Predicated region
    $region10: #{tpu_custom_call.1} parent=1 // pred_check
      _
    $region11: #{tpu_custom_call.1} parent=1 // pred_check_branch
      %46 = sbr.rel (0) target = $region13
    $region12: #{tpu_custom_call.1} parent=1 // pred_region
      %s48 = ssub.s32 256, 256
      %49 = vsyncadd [#allocation6], %s48
      %s51 = sshll.u32 [#allocation7], 4
      %s52 = int_to_ptr.vmem [resolvable:$true] %s51
      %54 = dma.hbm_to_vmem [thread:$0]  %s2, 256, %s52, [#allocation6]
    $region13: #{tpu_custom_call.1} parent=1 // pred_fallthru
      _
    // Predicated region
    $region14: #{tpu_custom_call.1} parent=1 // pred_check
      _
    $region15: #{tpu_custom_call.1} parent=1 // pred_check_branch
      %56 = sbr.rel (0) target = $region17
    $region16: #{tpu_custom_call.1} parent=1 // pred_region
      %s58 = ssub.s32 192, 192
      %59 = vsyncadd [#allocation9], %s58
      %s60 = sshll.u32 [#allocation8], 4
      %s61 = int_to_ptr.vmem [resolvable:$true] %s60
      %66 = dma.hbm_to_vmem [thread:$0]  %s3, 192, %s61, [#allocation9], 64, 64, 4
    $region17: #{tpu_custom_call.1} parent=1 // pred_fallthru
      _
    // Predicated region
    $region18: #{tpu_custom_call.1} parent=1 // pred_check
      _
    $region19: #{tpu_custom_call.1} parent=1 // pred_check_branch
      %68 = sbr.rel (0) target = $region21
    $region20: #{tpu_custom_call.1} parent=1 // pred_region
      _
    $region21: #{tpu_custom_call.1} parent=1 // pred_fallthru
      _
    // Predicated region
    $region22: #{tpu_custom_call.1} parent=1 // pred_check
      _
    $region23: #{tpu_custom_call.1} parent=1 // pred_check_branch
      %70 = sbr.rel (0) target = $region25
    $region24: #{tpu_custom_call.1} parent=1 // pred_region
      %s72 = ssub.s32 2048, 2048
      %73 = vsyncadd [#allocation9], %s72
      %s74 = sshll.u32 [#allocation10], 4
      %s75 = int_to_ptr.vmem [resolvable:$true] %s74
      %80 = dma.hbm_to_vmem [thread:$0]  %s5, 2048, %s75, [#allocation9], 128, 128, 8
    $region25: #{tpu_custom_call.1} parent=1 // pred_fallthru
      _
    // Predicated region
    $region26: #{tpu_custom_call.1} parent=1 // pred_check
      _
    $region27: #{tpu_custom_call.1} parent=1 // pred_check_branch
      %82 = sbr.rel (0) target = $region29
    $region28: #{tpu_custom_call.1} parent=1 // pred_region
      _
    $region29: #{tpu_custom_call.1} parent=1 // pred_fallthru
      _
    // Predicated region
    $region30: #{tpu_custom_call.1} parent=1 // pred_check
      _
    $region31: #{tpu_custom_call.1} parent=1 // pred_check_branch
      %84 = sbr.rel (0) target = $region33
    $region32: #{tpu_custom_call.1} parent=1 // pred_region
      %s86 = ssub.s32 32768, 32768
      %87 = vsyncadd [#allocation12], %s86
      %s88 = sshll.u32 [#allocation11], 4
      %s89 = int_to_ptr.vmem [resolvable:$true] %s88
      %94 = dma.hbm_to_vmem [thread:$0]  %s7, 32768, %s89, [#allocation12], 512, 512, 32
    $region33: #{tpu_custom_call.1} parent=1 // pred_fallthru
      _
    // Predicated region
    $region34: #{tpu_custom_call.1} parent=1 // pred_check
      _
    $region35: #{tpu_custom_call.1} parent=1 // pred_check_branch
      %96 = sbr.rel (0) target = $region37
    $region36: #{tpu_custom_call.1} parent=1 // pred_region
      _
    $region37: #{tpu_custom_call.1} parent=1 // pred_fallthru
      _
    // Predicated region
    $region38: #{tpu_custom_call.1} parent=1 // pred_check
      _
    $region39: #{tpu_custom_call.1} parent=1 // pred_check_branch
      %98 = sbr.rel (0) target = $region41
    $region40: #{tpu_custom_call.1} parent=1 // pred_region
      %s100 = ssub.s32 2048, 2048
      %101 = vsyncadd [#allocation12], %s100
      %s102 = sshll.u32 [#allocation13], 4
      %s103 = int_to_ptr.vmem [resolvable:$true] %s102
      %108 = dma.hbm_to_vmem [thread:$0]  %s9, 2048, %s103, [#allocation12], 64, 64, 4
    $region41: #{tpu_custom_call.1} parent=1 // pred_fallthru
      _
    // Predicated region
    $region42: #{tpu_custom_call.1} parent=1 // pred_check
      _
    $region43: #{tpu_custom_call.1} parent=1 // pred_check_branch
      %110 = sbr.rel (0) target = $region45
    $region44: #{tpu_custom_call.1} parent=1 // pred_region
      _
    $region45: #{tpu_custom_call.1} parent=1 // pred_fallthru
      _
    // Predicated region
    $region46: #{tpu_custom_call.1} parent=1 // pred_check
      _
    $region47: #{tpu_custom_call.1} parent=1 // pred_check_branch
      %112 = sbr.rel (0) target = $region49
    $region48: #{tpu_custom_call.1} parent=1 // pred_region
      %113 = dma.done [#allocation3], 128
    $region49: #{tpu_custom_call.1} parent=1 // pred_fallthru
      _
    // Predicated region
    $region50: #{tpu_custom_call.1} parent=1 // pred_check
      _
    $region51: #{tpu_custom_call.1} parent=1 // pred_check_branch
      %115 = sbr.rel (0) target = $region53
    $region52: #{tpu_custom_call.1} parent=1 // pred_region
      %116 = dma.done [#allocation6], 256
    $region53: #{tpu_custom_call.1} parent=1 // pred_fallthru
      _
    // Predicated region
    $region54: #{tpu_custom_call.1} parent=1 // pred_check
      _
    $region55: #{tpu_custom_call.1} parent=1 // pred_check_branch
      %118 = sbr.rel (0) target = $region57
    $region56: #{tpu_custom_call.1} parent=1 // pred_region
      %119 = dma.done [#allocation6], 256
    $region57: #{tpu_custom_call.1} parent=1 // pred_fallthru
      _
    // Predicated region
    $region58: #{tpu_custom_call.1} parent=1 // pred_check
      _
    $region59: #{tpu_custom_call.1} parent=1 // pred_check_branch
      %121 = sbr.rel (0) target = $region61
    $region60: #{tpu_custom_call.1} parent=1 // pred_region
      %122 = dma.done [#allocation9], 192
    $region61: #{tpu_custom_call.1} parent=1 // pred_fallthru
      _
    // Predicated region
    $region62: #{tpu_custom_call.1} parent=1 // pred_check
      _
    $region63: #{tpu_custom_call.1} parent=1 // pred_check_branch
      %124 = sbr.rel (0) target = $region65
    $region64: #{tpu_custom_call.1} parent=1 // pred_region
      %125 = dma.done [#allocation9], 2048
    $region65: #{tpu_custom_call.1} parent=1 // pred_fallthru
      _
    // Predicated region
    $region66: #{tpu_custom_call.1} parent=1 // pred_check
      _
    $region67: #{tpu_custom_call.1} parent=1 // pred_check_branch
      %127 = sbr.rel (0) target = $region69
    $region68: #{tpu_custom_call.1} parent=1 // pred_region
      %128 = dma.done [#allocation12], 32768
    $region69: #{tpu_custom_call.1} parent=1 // pred_fallthru
      _
    // Predicated region
    $region70: #{tpu_custom_call.1} parent=1 // pred_check
      _
    $region71: #{tpu_custom_call.1} parent=1 // pred_check_branch
      %130 = sbr.rel (0) target = $region73
    $region72: #{tpu_custom_call.1} parent=1 // pred_region
      %131 = dma.done [#allocation12], 2048
    $region73: #{tpu_custom_call.1} parent=1 // pred_fallthru
      _
    %v133 = vld [vmem:[#allocation2] sm:$0xff]
    %v134 = vpack.c.bf16 %v133, %v133
    %v135 = vld [vmem:[#allocation8] sm:$0xf]
    %v136 = vld [vmem:[#allocation8 + $0x4] sm:$0xf]
    %v137 = vld [vmem:[#allocation8 + $0x8] sm:$0xf]
    %v138 = vld [vmem:[%s4] sm:$0x1]
    %v140 = vlaneseq
    %v141 = vshrl.u32 %v140, 7
    %v142 = vsub.s32 0, %v141
    %v143 = vrot.slane %v138, %v142
    %v148 = vunpack.c.l.b16 %v135
    %v149 = vunpack.c.l.b16 %v136
    %v150 = vunpack.c.l.b16 %v137
    %v151 = vpack.c.b16 %v149, %v148
    %v152 = vpack.c.b16 %v150, %v150
    %vm154 = vcmask 195584
    %v156 = vsel %vm154, %v134, 0
    %vm158 = vcmask 1043456
    %v160 = vsel %vm158, %v152, 0
    %162 = vmatprep.subr.bf16.mxu0 0
    %163 = vmatpush1.bf16.msra.mxu0 %v151
    %164 = vmatprep.subr.bf16.mxu0 0
    %165 = vmatpush1.bf16.msra.mxu0 %v160
    %166 = vmatprep.subr.bf16.mxu0 0
    %167 = vmatpush1.bf16.msra.mxu0 0
    %168 = vmatprep.subr.bf16.mxu0 0
    %169 = vmatpush1.bf16.msra.mxu0 0
    %170 = vmatprep.subr.bf16.mxu0 0
    %171 = vmatpush1.bf16.msra.mxu0 0
    %172 = vmatprep.subr.bf16.mxu0 0
    %173 = vmatpush1.bf16.msra.mxu0 0
    %174 = vmatprep.subr.bf16.mxu0 0
    %175 = vmatpush1.bf16.msra.mxu0 0
    %176 = vmatprep.subr.bf16.mxu0 0
    %177 = vmatpush1.bf16.msra.mxu0 0
    %178 = vmatprep.subr.bf16.mxu0 0
    %179 = vmatpush1.bf16.msra.mxu0 0
    %180 = vmatprep.subr.bf16.mxu0 0
    %181 = vmatpush1.bf16.msra.mxu0 0
    %182 = vmatprep.subr.bf16.mxu0 0
    %183 = vmatpush1.bf16.msra.mxu0 0
    %184 = vmatprep.subr.bf16.mxu0 0
    %185 = vmatpush1.bf16.msra.mxu0 0
    %186 = vmatprep.subr.bf16.mxu0 0
    %187 = vmatpush1.bf16.msra.mxu0 0
    %188 = vmatprep.subr.bf16.mxu0 0
    %189 = vmatpush1.bf16.msra.mxu0 0
    %190 = vmatprep.subr.bf16.mxu0 0
    %191 = vmatpush1.bf16.msra.mxu0 0
    %192 = vmatprep.subr.bf16.mxu0 0
    %193 = vmatpush1.bf16.msra.mxu0 0
    %194 = vmatprep.mubr.bf16.mxu0 0
    %195 = vmatmul.mubr.bf16.gmra.mrb[0].mxu0 %v156
    %v196 = vpop.f32.mrb[0].mxu0
    %v197 = vadd.f32 %v143, %v196
    %v198 = vpop.f32.mrb[0].mxu0
    %v199 = vpop.f32.mrb[0].mxu0
    %v200 = vpop.f32.mrb[0].mxu0
    %201 = vdwg.mxu0
    %v202 = vmax.f32 %v197, 0.0
    %v203 = vpack.c.bf16 %v202, %v202
    %v204 = vld [vmem:[#allocation10] sm:$0xff]
    %v205 = vld [vmem:[#allocation10 + $0x8] sm:$0xff]
    %v206 = vld [vmem:[#allocation10 + $0x10] sm:$0xff]
    %v207 = vld [vmem:[#allocation10 + $0x18] sm:$0xff]
    %v208 = vld [vmem:[#allocation10 + $0x20] sm:$0xff]
    %v209 = vld [vmem:[#allocation10 + $0x28] sm:$0xff]
    %v210 = vld [vmem:[#allocation10 + $0x30] sm:$0xff]
    %v211 = vld [vmem:[#allocation10 + $0x38] sm:$0xff]
    %v212 = vld [vmem:[#allocation10 + $0x40] sm:$0xff]
    %v213 = vld [vmem:[#allocation10 + $0x48] sm:$0xff]
    %v214 = vld [vmem:[#allocation10 + $0x50] sm:$0xff]
    %v215 = vld [vmem:[#allocation10 + $0x58] sm:$0xff]
    %v216 = vld [vmem:[#allocation10 + $0x60] sm:$0xff]
    %v217 = vld [vmem:[#allocation10 + $0x68] sm:$0xff]
    %v218 = vld [vmem:[#allocation10 + $0x70] sm:$0xff]
    %v219 = vld [vmem:[#allocation10 + $0x78] sm:$0xff]
    %v220 = vld [vmem:[%s6] sm:$0x3]
    %v222 = vlaneseq
    %v223 = vshrl.u32 %v222, 7
    %v224 = vsub.s32 0, %v223
    %v225 = vrot.slane %v220, %v224
    %v226 = vlaneseq
    %v227 = vshrl.u32 %v226, 7
    %v228 = vsub.s32 1, %v227
    %v229 = vrot.slane %v220, %v228
    %v248 = vunpack.c.l.b16 %v204
    %v249 = vunpack.c.h.b16 %v204
    %v250 = vunpack.c.l.b16 %v205
    %v251 = vunpack.c.h.b16 %v205
    %v252 = vunpack.c.l.b16 %v206
    %v253 = vunpack.c.h.b16 %v206
    %v254 = vunpack.c.l.b16 %v207
    %v255 = vunpack.c.h.b16 %v207
    %v256 = vunpack.c.l.b16 %v208
    %v257 = vunpack.c.h.b16 %v208
    %v258 = vunpack.c.l.b16 %v209
    %v259 = vunpack.c.h.b16 %v209
    %v260 = vunpack.c.l.b16 %v210
    %v261 = vunpack.c.h.b16 %v210
    %v262 = vunpack.c.l.b16 %v211
    %v263 = vunpack.c.h.b16 %v211
    %v264 = vunpack.c.l.b16 %v212
    %v265 = vunpack.c.h.b16 %v212
    %v266 = vunpack.c.l.b16 %v213
    %v267 = vunpack.c.h.b16 %v213
    %v268 = vunpack.c.l.b16 %v214
    %v269 = vunpack.c.h.b16 %v214
    %v270 = vunpack.c.l.b16 %v215
    %v271 = vunpack.c.h.b16 %v215
    %v272 = vunpack.c.l.b16 %v216
    %v273 = vunpack.c.h.b16 %v216
    %v274 = vunpack.c.l.b16 %v217
    %v275 = vunpack.c.h.b16 %v217
    %v276 = vunpack.c.l.b16 %v218
    %v277 = vunpack.c.h.b16 %v218
    %v278 = vunpack.c.l.b16 %v219
    %v279 = vunpack.c.h.b16 %v219
    %v280 = vpack.c.b16 %v250, %v248
    %v281 = vpack.c.b16 %v251, %v249
    %v282 = vpack.c.b16 %v254, %v252
    %v283 = vpack.c.b16 %v255, %v253
    %v284 = vpack.c.b16 %v258, %v256
    %v285 = vpack.c.b16 %v259, %v257
    %v286 = vpack.c.b16 %v262, %v260
    %v287 = vpack.c.b16 %v263, %v261
    %v288 = vpack.c.b16 %v266, %v264
    %v289 = vpack.c.b16 %v267, %v265
    %v290 = vpack.c.b16 %v270, %v268
    %v291 = vpack.c.b16 %v271, %v269
    %v292 = vpack.c.b16 %v274, %v272
    %v293 = vpack.c.b16 %v275, %v273
    %v294 = vpack.c.b16 %v278, %v276
    %v295 = vpack.c.b16 %v279, %v277
    %312 = vmatprep.subr.bf16.mxu0 %v281
    %313 = vmatpush1.bf16.msra.mxu0 %v280
    %314 = vmatprep.subr.bf16.mxu0 %v283
    %315 = vmatpush1.bf16.msra.mxu0 %v282
    %316 = vmatprep.subr.bf16.mxu0 %v285
    %317 = vmatpush1.bf16.msra.mxu0 %v284
    %318 = vmatprep.subr.bf16.mxu0 %v287
    %319 = vmatpush1.bf16.msra.mxu0 %v286
    %320 = vmatprep.subr.bf16.mxu0 %v289
    %321 = vmatpush1.bf16.msra.mxu0 %v288
    %322 = vmatprep.subr.bf16.mxu0 %v291
    %323 = vmatpush1.bf16.msra.mxu0 %v290
    %324 = vmatprep.subr.bf16.mxu0 %v293
    %325 = vmatpush1.bf16.msra.mxu0 %v292
    %326 = vmatprep.subr.bf16.mxu0 %v295
    %327 = vmatpush1.bf16.msra.mxu0 %v294
    %328 = vmatprep.subr.bf16.mxu0 0
    %329 = vmatpush1.bf16.msra.mxu0 0
    %330 = vmatprep.subr.bf16.mxu0 0
    %331 = vmatpush1.bf16.msra.mxu0 0
    %332 = vmatprep.subr.bf16.mxu0 0
    %333 = vmatpush1.bf16.msra.mxu0 0
    %334 = vmatprep.subr.bf16.mxu0 0
    %335 = vmatpush1.bf16.msra.mxu0 0
    %336 = vmatprep.subr.bf16.mxu0 0
    %337 = vmatpush1.bf16.msra.mxu0 0
    %338 = vmatprep.subr.bf16.mxu0 0
    %339 = vmatpush1.bf16.msra.mxu0 0
    %340 = vmatprep.subr.bf16.mxu0 0
    %341 = vmatpush1.bf16.msra.mxu0 0
    %342 = vmatprep.subr.bf16.mxu0 0
    %343 = vmatpush1.bf16.msra.mxu0 0
    %344 = vmatprep.mubr.bf16.mxu0 0
    %345 = vmatmul.mubr.bf16.gmra.mrb[0].mxu0 %v203
    %v346 = vpop.f32.mrb[0].mxu0
    %v347 = vadd.f32 %v225, %v346
    %v348 = vpop.f32.mrb[0].mxu0
    %v349 = vadd.f32 %v229, %v348
    %v350 = vpop.f32.mrb[0].mxu0
    %v351 = vpop.f32.mrb[0].mxu0
    %352 = vdwg.mxu0
    %v353 = vmax.f32 %v347, 0.0
    %v354 = vmax.f32 %v349, 0.0
    %v355 = vld [vmem:[#allocation5] sm:$0xff]
    %v356 = vld [vmem:[#allocation5 + $0x8] sm:$0xff]
    %v357 = vpack.c.bf16 %v353, %v353
    %v358 = vpack.c.bf16 %v354, %v354
    %v359 = vpack.c.bf16 %v355, %v355
    %v360 = vpack.c.bf16 %v356, %v356
    %v361 = vld [vmem:[#allocation11] sm:$0xff]
    %v362 = vld [vmem:[#allocation11 + $0x8] sm:$0xff]
    %v363 = vld [vmem:[#allocation11 + $0x10] sm:$0xff]
    %v364 = vld [vmem:[#allocation11 + $0x18] sm:$0xff]
    %v365 = vld [vmem:[#allocation11 + $0x20] sm:$0xff]
    %v366 = vld [vmem:[#allocation11 + $0x28] sm:$0xff]
    %v367 = vld [vmem:[#allocation11 + $0x30] sm:$0xff]
    %v368 = vld [vmem:[#allocation11 + $0x38] sm:$0xff]
    %v369 = vld [vmem:[#allocation11 + $0x40] sm:$0xff]
    %v370 = vld [vmem:[#allocation11 + $0x48] sm:$0xff]
    %v371 = vld [vmem:[#allocation11 + $0x50] sm:$0xff]
    %v372 = vld [vmem:[#allocation11 + $0x58] sm:$0xff]
    %v373 = vld [vmem:[#allocation11 + $0x60] sm:$0xff]
    %v374 = vld [vmem:[#allocation11 + $0x68] sm:$0xff]
    %v375 = vld [vmem:[#allocation11 + $0x70] sm:$0xff]
    %v376 = vld [vmem:[#allocation11 + $0x78] sm:$0xff]
    %v377 = vld [vmem:[#allocation11 + $0x80] sm:$0xff]
    %v378 = vld [vmem:[#allocation11 + $0x88] sm:$0xff]
    %v379 = vld [vmem:[#allocation11 + $0x90] sm:$0xff]
    %v380 = vld [vmem:[#allocation11 + $0x98] sm:$0xff]
    %v381 = vld [vmem:[#allocation11 + $0xa0] sm:$0xff]
    %v382 = vld [vmem:[#allocation11 + $0xa8] sm:$0xff]
    %v383 = vld [vmem:[#allocation11 + $0xb0] sm:$0xff]
    %v384 = vld [vmem:[#allocation11 + $0xb8] sm:$0xff]
    %v385 = vld [vmem:[#allocation11 + $0xc0] sm:$0xff]
    %v386 = vld [vmem:[#allocation11 + $0xc8] sm:$0xff]
    %v387 = vld [vmem:[#allocation11 + $0xd0] sm:$0xff]
    %v388 = vld [vmem:[#allocation11 + $0xd8] sm:$0xff]
    %v389 = vld [vmem:[#allocation11 + $0xe0] sm:$0xff]
    %v390 = vld [vmem:[#allocation11 + $0xe8] sm:$0xff]
    %v391 = vld [vmem:[#allocation11 + $0xf0] sm:$0xff]
    %v392 = vld [vmem:[#allocation11 + $0xf8] sm:$0xff]
    %v393 = vld [vmem:[#allocation11 + $0x100] sm:$0xff]
    %v394 = vld [vmem:[#allocation11 + $0x108] sm:$0xff]
    %v395 = vld [vmem:[#allocation11 + $0x110] sm:$0xff]
    %v396 = vld [vmem:[#allocation11 + $0x118] sm:$0xff]
    %v397 = vld [vmem:[#allocation11 + $0x120] sm:$0xff]
    %v398 = vld [vmem:[#allocation11 + $0x128] sm:$0xff]
    %v399 = vld [vmem:[#allocation11 + $0x130] sm:$0xff]
    %v400 = vld [vmem:[#allocation11 + $0x138] sm:$0xff]
    %v401 = vld [vmem:[#allocation11 + $0x140] sm:$0xff]
    %v402 = vld [vmem:[#allocation11 + $0x148] sm:$0xff]
    %v403 = vld [vmem:[#allocation11 + $0x150] sm:$0xff]
    %v404 = vld [vmem:[#allocation11 + $0x158] sm:$0xff]
    %v405 = vld [vmem:[#allocation11 + $0x160] sm:$0xff]
    %v406 = vld [vmem:[#allocation11 + $0x168] sm:$0xff]
    %v407 = vld [vmem:[#allocation11 + $0x170] sm:$0xff]
    %v408 = vld [vmem:[#allocation11 + $0x178] sm:$0xff]
    %v409 = vld [vmem:[#allocation11 + $0x180] sm:$0xff]
    %v410 = vld [vmem:[#allocation11 + $0x188] sm:$0xff]
    %v411 = vld [vmem:[#allocation11 + $0x190] sm:$0xff]
    %v412 = vld [vmem:[#allocation11 + $0x198] sm:$0xff]
    %v413 = vld [vmem:[#allocation11 + $0x1a0] sm:$0xff]
    %v414 = vld [vmem:[#allocation11 + $0x1a8] sm:$0xff]
    %v415 = vld [vmem:[#allocation11 + $0x1b0] sm:$0xff]
    %v416 = vld [vmem:[#allocation11 + $0x1b8] sm:$0xff]
    %v417 = vld [vmem:[#allocation11 + $0x1c0] sm:$0xff]
    %v418 = vld [vmem:[#allocation11 + $0x1c8] sm:$0xff]
    %v419 = vld [vmem:[#allocation11 + $0x1d0] sm:$0xff]
    %v420 = vld [vmem:[#allocation11 + $0x1d8] sm:$0xff]
    %v421 = vld [vmem:[#allocation11 + $0x1e0] sm:$0xff]
    %v422 = vld [vmem:[#allocation11 + $0x1e8] sm:$0xff]
    %v423 = vld [vmem:[#allocation11 + $0x1f0] sm:$0xff]
    %v424 = vld [vmem:[#allocation11 + $0x1f8] sm:$0xff]
    %v425 = vld [vmem:[#allocation11 + $0x200] sm:$0xff]
    %v426 = vld [vmem:[#allocation11 + $0x208] sm:$0xff]
    %v427 = vld [vmem:[#allocation11 + $0x210] sm:$0xff]
    %v428 = vld [vmem:[#allocation11 + $0x218] sm:$0xff]
    %v429 = vld [vmem:[#allocation11 + $0x220] sm:$0xff]
    %v430 = vld [vmem:[#allocation11 + $0x228] sm:$0xff]
    %v431 = vld [vmem:[#allocation11 + $0x230] sm:$0xff]
    %v432 = vld [vmem:[#allocation11 + $0x238] sm:$0xff]
    %v433 = vld [vmem:[#allocation11 + $0x240] sm:$0xff]
    %v434 = vld [vmem:[#allocation11 + $0x248] sm:$0xff]
    %v435 = vld [vmem:[#allocation11 + $0x250] sm:$0xff]
    %v436 = vld [vmem:[#allocation11 + $0x258] sm:$0xff]
    %v437 = vld [vmem:[#allocation11 + $0x260] sm:$0xff]
    %v438 = vld [vmem:[#allocation11 + $0x268] sm:$0xff]
    %v439 = vld [vmem:[#allocation11 + $0x270] sm:$0xff]
    %v440 = vld [vmem:[#allocation11 + $0x278] sm:$0xff]
    %v441 = vld [vmem:[#allocation11 + $0x280] sm:$0xff]
    %v442 = vld [vmem:[#allocation11 + $0x288] sm:$0xff]
    %v443 = vld [vmem:[#allocation11 + $0x290] sm:$0xff]
    %v444 = vld [vmem:[#allocation11 + $0x298] sm:$0xff]
    %v445 = vld [vmem:[#allocation11 + $0x2a0] sm:$0xff]
    %v446 = vld [vmem:[#allocation11 + $0x2a8] sm:$0xff]
    %v447 = vld [vmem:[#allocation11 + $0x2b0] sm:$0xff]
    %v448 = vld [vmem:[#allocation11 + $0x2b8] sm:$0xff]
    %v449 = vld [vmem:[#allocation11 + $0x2c0] sm:$0xff]
    %v450 = vld [vmem:[#allocation11 + $0x2c8] sm:$0xff]
    %v451 = vld [vmem:[#allocation11 + $0x2d0] sm:$0xff]
    %v452 = vld [vmem:[#allocation11 + $0x2d8] sm:$0xff]
    %v453 = vld [vmem:[#allocation11 + $0x2e0] sm:$0xff]
    %v454 = vld [vmem:[#allocation11 + $0x2e8] sm:$0xff]
    %v455 = vld [vmem:[#allocation11 + $0x2f0] sm:$0xff]
    %v456 = vld [vmem:[#allocation11 + $0x2f8] sm:$0xff]
    %v457 = vld [vmem:[#allocation11 + $0x300] sm:$0xff]
    %v458 = vld [vmem:[#allocation11 + $0x308] sm:$0xff]
    %v459 = vld [vmem:[#allocation11 + $0x310] sm:$0xff]
    %v460 = vld [vmem:[#allocation11 + $0x318] sm:$0xff]
    %v461 = vld [vmem:[#allocation11 + $0x320] sm:$0xff]
    %v462 = vld [vmem:[#allocation11 + $0x328] sm:$0xff]
    %v463 = vld [vmem:[#allocation11 + $0x330] sm:$0xff]
    %v464 = vld [vmem:[#allocation11 + $0x338] sm:$0xff]
    %v465 = vld [vmem:[#allocation11 + $0x340] sm:$0xff]
    %v466 = vld [vmem:[#allocation11 + $0x348] sm:$0xff]
    %v467 = vld [vmem:[#allocation11 + $0x350] sm:$0xff]
    %v468 = vld [vmem:[#allocation11 + $0x358] sm:$0xff]
    %v469 = vld [vmem:[#allocation11 + $0x360] sm:$0xff]
    %v470 = vld [vmem:[#allocation11 + $0x368] sm:$0xff]
    %v471 = vld [vmem:[#allocation11 + $0x370] sm:$0xff]
    %v472 = vld [vmem:[#allocation11 + $0x378] sm:$0xff]
    %v473 = vld [vmem:[#allocation11 + $0x380] sm:$0xff]
    %v474 = vld [vmem:[#allocation11 + $0x388] sm:$0xff]
    %v475 = vld [vmem:[#allocation11 + $0x390] sm:$0xff]
    %v476 = vld [vmem:[#allocation11 + $0x398] sm:$0xff]
    %v477 = vld [vmem:[#allocation11 + $0x3a0] sm:$0xff]
    %v478 = vld [vmem:[#allocation11 + $0x3a8] sm:$0xff]
    %v479 = vld [vmem:[#allocation11 + $0x3b0] sm:$0xff]
    %v480 = vld [vmem:[#allocation11 + $0x3b8] sm:$0xff]
    %v481 = vld [vmem:[#allocation11 + $0x3c0] sm:$0xff]
    %v482 = vld [vmem:[#allocation11 + $0x3c8] sm:$0xff]
    %v483 = vld [vmem:[#allocation11 + $0x3d0] sm:$0xff]
    %v484 = vld [vmem:[#allocation11 + $0x3d8] sm:$0xff]
    %v485 = vld [vmem:[#allocation11 + $0x3e0] sm:$0xff]
    %v486 = vld [vmem:[#allocation11 + $0x3e8] sm:$0xff]
    %v487 = vld [vmem:[#allocation11 + $0x3f0] sm:$0xff]
    %v488 = vld [vmem:[#allocation11 + $0x3f8] sm:$0xff]
    %v489 = vld [vmem:[#allocation11 + $0x400] sm:$0xff]
    %v490 = vld [vmem:[#allocation11 + $0x408] sm:$0xff]
    %v491 = vld [vmem:[#allocation11 + $0x410] sm:$0xff]
    %v492 = vld [vmem:[#allocation11 + $0x418] sm:$0xff]
    %v493 = vld [vmem:[#allocation11 + $0x420] sm:$0xff]
    %v494 = vld [vmem:[#allocation11 + $0x428] sm:$0xff]
    %v495 = vld [vmem:[#allocation11 + $0x430] sm:$0xff]
    %v496 = vld [vmem:[#allocation11 + $0x438] sm:$0xff]
    %v497 = vld [vmem:[#allocation11 + $0x440] sm:$0xff]
    %v498 = vld [vmem:[#allocation11 + $0x448] sm:$0xff]
    %v499 = vld [vmem:[#allocation11 + $0x450] sm:$0xff]
    %v500 = vld [vmem:[#allocation11 + $0x458] sm:$0xff]
    %v501 = vld [vmem:[#allocation11 + $0x460] sm:$0xff]
    %v502 = vld [vmem:[#allocation11 + $0x468] sm:$0xff]
    %v503 = vld [vmem:[#allocation11 + $0x470] sm:$0xff]
    %v504 = vld [vmem:[#allocation11 + $0x478] sm:$0xff]
    %v505 = vld [vmem:[#allocation11 + $0x480] sm:$0xff]
    %v506 = vld [vmem:[#allocation11 + $0x488] sm:$0xff]
    %v507 = vld [vmem:[#allocation11 + $0x490] sm:$0xff]
    %v508 = vld [vmem:[#allocation11 + $0x498] sm:$0xff]
    %v509 = vld [vmem:[#allocation11 + $0x4a0] sm:$0xff]
    %v510 = vld [vmem:[#allocation11 + $0x4a8] sm:$0xff]
    %v511 = vld [vmem:[#allocation11 + $0x4b0] sm:$0xff]
    %v512 = vld [vmem:[#allocation11 + $0x4b8] sm:$0xff]
    %v513 = vld [vmem:[#allocation11 + $0x4c0] sm:$0xff]
    %v514 = vld [vmem:[#allocation11 + $0x4c8] sm:$0xff]
    %v515 = vld [vmem:[#allocation11 + $0x4d0] sm:$0xff]
    %v516 = vld [vmem:[#allocation11 + $0x4d8] sm:$0xff]
    %v517 = vld [vmem:[#allocation11 + $0x4e0] sm:$0xff]
    %v518 = vld [vmem:[#allocation11 + $0x4e8] sm:$0xff]
    %v519 = vld [vmem:[#allocation11 + $0x4f0] sm:$0xff]
    %v520 = vld [vmem:[#allocation11 + $0x4f8] sm:$0xff]
    %v521 = vld [vmem:[#allocation11 + $0x500] sm:$0xff]
    %v522 = vld [vmem:[#allocation11 + $0x508] sm:$0xff]
    %v523 = vld [vmem:[#allocation11 + $0x510] sm:$0xff]
    %v524 = vld [vmem:[#allocation11 + $0x518] sm:$0xff]
    %v525 = vld [vmem:[#allocation11 + $0x520] sm:$0xff]
    %v526 = vld [vmem:[#allocation11 + $0x528] sm:$0xff]
    %v527 = vld [vmem:[#allocation11 + $0x530] sm:$0xff]
    %v528 = vld [vmem:[#allocation11 + $0x538] sm:$0xff]
    %v529 = vld [vmem:[#allocation11 + $0x540] sm:$0xff]
    %v530 = vld [vmem:[#allocation11 + $0x548] sm:$0xff]
    %v531 = vld [vmem:[#allocation11 + $0x550] sm:$0xff]
    %v532 = vld [vmem:[#allocation11 + $0x558] sm:$0xff]
    %v533 = vld [vmem:[#allocation11 + $0x560] sm:$0xff]
    %v534 = vld [vmem:[#allocation11 + $0x568] sm:$0xff]
    %v535 = vld [vmem:[#allocation11 + $0x570] sm:$0xff]
    %v536 = vld [vmem:[#allocation11 + $0x578] sm:$0xff]
    %v537 = vld [vmem:[#allocation11 + $0x580] sm:$0xff]
    %v538 = vld [vmem:[#allocation11 + $0x588] sm:$0xff]
    %v539 = vld [vmem:[#allocation11 + $0x590] sm:$0xff]
    %v540 = vld [vmem:[#allocation11 + $0x598] sm:$0xff]
    %v541 = vld [vmem:[#allocation11 + $0x5a0] sm:$0xff]
    %v542 = vld [vmem:[#allocation11 + $0x5a8] sm:$0xff]
    %v543 = vld [vmem:[#allocation11 + $0x5b0] sm:$0xff]
    %v544 = vld [vmem:[#allocation11 + $0x5b8] sm:$0xff]
    %v545 = vld [vmem:[#allocation11 + $0x5c0] sm:$0xff]
    %v546 = vld [vmem:[#allocation11 + $0x5c8] sm:$0xff]
    %v547 = vld [vmem:[#allocation11 + $0x5d0] sm:$0xff]
    %v548 = vld [vmem:[#allocation11 + $0x5d8] sm:$0xff]
    %v549 = vld [vmem:[#allocation11 + $0x5e0] sm:$0xff]
    %v550 = vld [vmem:[#allocation11 + $0x5e8] sm:$0xff]
    %v551 = vld [vmem:[#allocation11 + $0x5f0] sm:$0xff]
    %v552 = vld [vmem:[#allocation11 + $0x5f8] sm:$0xff]
    %v553 = vld [vmem:[#allocation11 + $0x600] sm:$0xff]
    %v554 = vld [vmem:[#allocation11 + $0x608] sm:$0xff]
    %v555 = vld [vmem:[#allocation11 + $0x610] sm:$0xff]
    %v556 = vld [vmem:[#allocation11 + $0x618] sm:$0xff]
    %v557 = vld [vmem:[#allocation11 + $0x620] sm:$0xff]
    %v558 = vld [vmem:[#allocation11 + $0x628] sm:$0xff]
    %v559 = vld [vmem:[#allocation11 + $0x630] sm:$0xff]
    %v560 = vld [vmem:[#allocation11 + $0x638] sm:$0xff]
    %v561 = vld [vmem:[#allocation11 + $0x640] sm:$0xff]
    %v562 = vld [vmem:[#allocation11 + $0x648] sm:$0xff]
    %v563 = vld [vmem:[#allocation11 + $0x650] sm:$0xff]
    %v564 = vld [vmem:[#allocation11 + $0x658] sm:$0xff]
    %v565 = vld [vmem:[#allocation11 + $0x660] sm:$0xff]
    %v566 = vld [vmem:[#allocation11 + $0x668] sm:$0xff]
    %v567 = vld [vmem:[#allocation11 + $0x670] sm:$0xff]
    %v568 = vld [vmem:[#allocation11 + $0x678] sm:$0xff]
    %v569 = vld [vmem:[#allocation11 + $0x680] sm:$0xff]
    %v570 = vld [vmem:[#allocation11 + $0x688] sm:$0xff]
    %v571 = vld [vmem:[#allocation11 + $0x690] sm:$0xff]
    %v572 = vld [vmem:[#allocation11 + $0x698] sm:$0xff]
    %v573 = vld [vmem:[#allocation11 + $0x6a0] sm:$0xff]
    %v574 = vld [vmem:[#allocation11 + $0x6a8] sm:$0xff]
    %v575 = vld [vmem:[#allocation11 + $0x6b0] sm:$0xff]
    %v576 = vld [vmem:[#allocation11 + $0x6b8] sm:$0xff]
    %v577 = vld [vmem:[#allocation11 + $0x6c0] sm:$0xff]
    %v578 = vld [vmem:[#allocation11 + $0x6c8] sm:$0xff]
    %v579 = vld [vmem:[#allocation11 + $0x6d0] sm:$0xff]
    %v580 = vld [vmem:[#allocation11 + $0x6d8] sm:$0xff]
    %v581 = vld [vmem:[#allocation11 + $0x6e0] sm:$0xff]
    %v582 = vld [vmem:[#allocation11 + $0x6e8] sm:$0xff]
    %v583 = vld [vmem:[#allocation11 + $0x6f0] sm:$0xff]
    %v584 = vld [vmem:[#allocation11 + $0x6f8] sm:$0xff]
    %v585 = vld [vmem:[#allocation11 + $0x700] sm:$0xff]
    %v586 = vld [vmem:[#allocation11 + $0x708] sm:$0xff]
    %v587 = vld [vmem:[#allocation11 + $0x710] sm:$0xff]
    %v588 = vld [vmem:[#allocation11 + $0x718] sm:$0xff]
    %v589 = vld [vmem:[#allocation11 + $0x720] sm:$0xff]
    %v590 = vld [vmem:[#allocation11 + $0x728] sm:$0xff]
    %v591 = vld [vmem:[#allocation11 + $0x730] sm:$0xff]
    %v592 = vld [vmem:[#allocation11 + $0x738] sm:$0xff]
    %v593 = vld [vmem:[#allocation11 + $0x740] sm:$0xff]
    %v594 = vld [vmem:[#allocation11 + $0x748] sm:$0xff]
    %v595 = vld [vmem:[#allocation11 + $0x750] sm:$0xff]
    %v596 = vld [vmem:[#allocation11 + $0x758] sm:$0xff]
    %v597 = vld [vmem:[#allocation11 + $0x760] sm:$0xff]
    %v598 = vld [vmem:[#allocation11 + $0x768] sm:$0xff]
    %v599 = vld [vmem:[#allocation11 + $0x770] sm:$0xff]
    %v600 = vld [vmem:[#allocation11 + $0x778] sm:$0xff]
    %v601 = vld [vmem:[#allocation11 + $0x780] sm:$0xff]
    %v602 = vld [vmem:[#allocation11 + $0x788] sm:$0xff]
    %v603 = vld [vmem:[#allocation11 + $0x790] sm:$0xff]
    %v604 = vld [vmem:[#allocation11 + $0x798] sm:$0xff]
    %v605 = vld [vmem:[#allocation11 + $0x7a0] sm:$0xff]
    %v606 = vld [vmem:[#allocation11 + $0x7a8] sm:$0xff]
    %v607 = vld [vmem:[#allocation11 + $0x7b0] sm:$0xff]
    %v608 = vld [vmem:[#allocation11 + $0x7b8] sm:$0xff]
    %v609 = vld [vmem:[#allocation11 + $0x7c0] sm:$0xff]
    %v610 = vld [vmem:[#allocation11 + $0x7c8] sm:$0xff]
    %v611 = vld [vmem:[#allocation11 + $0x7d0] sm:$0xff]
    %v612 = vld [vmem:[#allocation11 + $0x7d8] sm:$0xff]
    %v613 = vld [vmem:[#allocation11 + $0x7e0] sm:$0xff]
    %v614 = vld [vmem:[#allocation11 + $0x7e8] sm:$0xff]
    %v615 = vld [vmem:[#allocation11 + $0x7f0] sm:$0xff]
    %v616 = vld [vmem:[#allocation11 + $0x7f8] sm:$0xff]
    %v617 = vld [vmem:[%s8] sm:$0xff]
    %v619 = vlaneseq
    %v620 = vshrl.u32 %v619, 7
    %v621 = vsub.s32 0, %v620
    %v622 = vrot.slane %v617, %v621
    %v623 = vlaneseq
    %v624 = vshrl.u32 %v623, 7
    %v625 = vsub.s32 1, %v624
    %v626 = vrot.slane %v617, %v625
    %v627 = vlaneseq
    %v628 = vshrl.u32 %v627, 7
    %v629 = vsub.s32 2, %v628
    %v630 = vrot.slane %v617, %v629
    %v631 = vlaneseq
    %v632 = vshrl.u32 %v631, 7
    %v633 = vsub.s32 3, %v632
    %v634 = vrot.slane %v617, %v633
    %v635 = vlaneseq
    %v636 = vshrl.u32 %v635, 7
    %v637 = vsub.s32 4, %v636
    %v638 = vrot.slane %v617, %v637
    %v639 = vlaneseq
    %v640 = vshrl.u32 %v639, 7
    %v641 = vsub.s32 5, %v640
    %v642 = vrot.slane %v617, %v641
    %v643 = vlaneseq
    %v644 = vshrl.u32 %v643, 7
    %v645 = vsub.s32 6, %v644
    %v646 = vrot.slane %v617, %v645
    %v647 = vlaneseq
    %v648 = vshrl.u32 %v647, 7
    %v649 = vsub.s32 7, %v648
    %v650 = vrot.slane %v617, %v649
    %v915 = vunpack.c.l.b16 %v361
    %v916 = vunpack.c.h.b16 %v361
    %v917 = vunpack.c.l.b16 %v362
    %v918 = vunpack.c.h.b16 %v362
    %v919 = vunpack.c.l.b16 %v363
    %v920 = vunpack.c.h.b16 %v363
    %v921 = vunpack.c.l.b16 %v364
    %v922 = vunpack.c.h.b16 %v364
    %v923 = vunpack.c.l.b16 %v365
    %v924 = vunpack.c.h.b16 %v365
    %v925 = vunpack.c.l.b16 %v366
    %v926 = vunpack.c.h.b16 %v366
    %v927 = vunpack.c.l.b16 %v367
    %v928 = vunpack.c.h.b16 %v367
    %v929 = vunpack.c.l.b16 %v368
    %v930 = vunpack.c.h.b16 %v368
    %v931 = vunpack.c.l.b16 %v369
    %v932 = vunpack.c.h.b16 %v369
    %v933 = vunpack.c.l.b16 %v370
    %v934 = vunpack.c.h.b16 %v370
    %v935 = vunpack.c.l.b16 %v371
    %v936 = vunpack.c.h.b16 %v371
    %v937 = vunpack.c.l.b16 %v372
    %v938 = vunpack.c.h.b16 %v372
    %v939 = vunpack.c.l.b16 %v373
    %v940 = vunpack.c.h.b16 %v373
    %v941 = vunpack.c.l.b16 %v374
    %v942 = vunpack.c.h.b16 %v374
    %v943 = vunpack.c.l.b16 %v375
    %v944 = vunpack.c.h.b16 %v375
    %v945 = vunpack.c.l.b16 %v376
    %v946 = vunpack.c.h.b16 %v376
    %v947 = vunpack.c.l.b16 %v377
    %v948 = vunpack.c.h.b16 %v377
    %v949 = vunpack.c.l.b16 %v378
    %v950 = vunpack.c.h.b16 %v378
    %v951 = vunpack.c.l.b16 %v379
    %v952 = vunpack.c.h.b16 %v379
    %v953 = vunpack.c.l.b16 %v380
    %v954 = vunpack.c.h.b16 %v380
    %v955 = vunpack.c.l.b16 %v381
    %v956 = vunpack.c.h.b16 %v381
    %v957 = vunpack.c.l.b16 %v382
    %v958 = vunpack.c.h.b16 %v382
    %v959 = vunpack.c.l.b16 %v383
    %v960 = vunpack.c.h.b16 %v383
    %v961 = vunpack.c.l.b16 %v384
    %v962 = vunpack.c.h.b16 %v384
    %v963 = vunpack.c.l.b16 %v385
    %v964 = vunpack.c.h.b16 %v385
    %v965 = vunpack.c.l.b16 %v386
    %v966 = vunpack.c.h.b16 %v386
    %v967 = vunpack.c.l.b16 %v387
    %v968 = vunpack.c.h.b16 %v387
    %v969 = vunpack.c.l.b16 %v388
    %v970 = vunpack.c.h.b16 %v388
    %v971 = vunpack.c.l.b16 %v389
    %v972 = vunpack.c.h.b16 %v389
    %v973 = vunpack.c.l.b16 %v390
    %v974 = vunpack.c.h.b16 %v390
    %v975 = vunpack.c.l.b16 %v391
    %v976 = vunpack.c.h.b16 %v391
    %v977 = vunpack.c.l.b16 %v392
    %v978 = vunpack.c.h.b16 %v392
    %v979 = vunpack.c.l.b16 %v393
    %v980 = vunpack.c.h.b16 %v393
    %v981 = vunpack.c.l.b16 %v394
    %v982 = vunpack.c.h.b16 %v394
    %v983 = vunpack.c.l.b16 %v395
    %v984 = vunpack.c.h.b16 %v395
    %v985 = vunpack.c.l.b16 %v396
    %v986 = vunpack.c.h.b16 %v396
    %v987 = vunpack.c.l.b16 %v397
    %v988 = vunpack.c.h.b16 %v397
    %v989 = vunpack.c.l.b16 %v398
    %v990 = vunpack.c.h.b16 %v398
    %v991 = vunpack.c.l.b16 %v399
    %v992 = vunpack.c.h.b16 %v399
    %v993 = vunpack.c.l.b16 %v400
    %v994 = vunpack.c.h.b16 %v400
    %v995 = vunpack.c.l.b16 %v401
    %v996 = vunpack.c.h.b16 %v401
    %v997 = vunpack.c.l.b16 %v402
    %v998 = vunpack.c.h.b16 %v402
    %v999 = vunpack.c.l.b16 %v403
    %v1000 = vunpack.c.h.b16 %v403
    %v1001 = vunpack.c.l.b16 %v404
    %v1002 = vunpack.c.h.b16 %v404
    %v1003 = vunpack.c.l.b16 %v405
    %v1004 = vunpack.c.h.b16 %v405
    %v1005 = vunpack.c.l.b16 %v406
    %v1006 = vunpack.c.h.b16 %v406
    %v1007 = vunpack.c.l.b16 %v407
    %v1008 = vunpack.c.h.b16 %v407
    %v1009 = vunpack.c.l.b16 %v408
    %v1010 = vunpack.c.h.b16 %v408
    %v1011 = vunpack.c.l.b16 %v409
    %v1012 = vunpack.c.h.b16 %v409
    %v1013 = vunpack.c.l.b16 %v410
    %v1014 = vunpack.c.h.b16 %v410
    %v1015 = vunpack.c.l.b16 %v411
    %v1016 = vunpack.c.h.b16 %v411
    %v1017 = vunpack.c.l.b16 %v412
    %v1018 = vunpack.c.h.b16 %v412
    %v1019 = vunpack.c.l.b16 %v413
    %v1020 = vunpack.c.h.b16 %v413
    %v1021 = vunpack.c.l.b16 %v414
    %v1022 = vunpack.c.h.b16 %v414
    %v1023 = vunpack.c.l.b16 %v415
    %v1024 = vunpack.c.h.b16 %v415
    %v1025 = vunpack.c.l.b16 %v416
    %v1026 = vunpack.c.h.b16 %v416
    %v1027 = vunpack.c.l.b16 %v417
    %v1028 = vunpack.c.h.b16 %v417
    %v1029 = vunpack.c.l.b16 %v418
    %v1030 = vunpack.c.h.b16 %v418
    %v1031 = vunpack.c.l.b16 %v419
    %v1032 = vunpack.c.h.b16 %v419
    %v1033 = vunpack.c.l.b16 %v420
    %v1034 = vunpack.c.h.b16 %v420
    %v1035 = vunpack.c.l.b16 %v421
    %v1036 = vunpack.c.h.b16 %v421
    %v1037 = vunpack.c.l.b16 %v422
    %v1038 = vunpack.c.h.b16 %v422
    %v1039 = vunpack.c.l.b16 %v423
    %v1040 = vunpack.c.h.b16 %v423
    %v1041 = vunpack.c.l.b16 %v424
    %v1042 = vunpack.c.h.b16 %v424
    %v1043 = vunpack.c.l.b16 %v425
    %v1044 = vunpack.c.h.b16 %v425
    %v1045 = vunpack.c.l.b16 %v426
    %v1046 = vunpack.c.h.b16 %v426
    %v1047 = vunpack.c.l.b16 %v427
    %v1048 = vunpack.c.h.b16 %v427
    %v1049 = vunpack.c.l.b16 %v428
    %v1050 = vunpack.c.h.b16 %v428
    %v1051 = vunpack.c.l.b16 %v429
    %v1052 = vunpack.c.h.b16 %v429
    %v1053 = vunpack.c.l.b16 %v430
    %v1054 = vunpack.c.h.b16 %v430
    %v1055 = vunpack.c.l.b16 %v431
    %v1056 = vunpack.c.h.b16 %v431
    %v1057 = vunpack.c.l.b16 %v432
    %v1058 = vunpack.c.h.b16 %v432
    %v1059 = vunpack.c.l.b16 %v433
    %v1060 = vunpack.c.h.b16 %v433
    %v1061 = vunpack.c.l.b16 %v434
    %v1062 = vunpack.c.h.b16 %v434
    %v1063 = vunpack.c.l.b16 %v435
    %v1064 = vunpack.c.h.b16 %v435
    %v1065 = vunpack.c.l.b16 %v436
    %v1066 = vunpack.c.h.b16 %v436
    %v1067 = vunpack.c.l.b16 %v437
    %v1068 = vunpack.c.h.b16 %v437
    %v1069 = vunpack.c.l.b16 %v438
    %v1070 = vunpack.c.h.b16 %v438
    %v1071 = vunpack.c.l.b16 %v439
    %v1072 = vunpack.c.h.b16 %v439
    %v1073 = vunpack.c.l.b16 %v440
    %v1074 = vunpack.c.h.b16 %v440
    %v1075 = vunpack.c.l.b16 %v441
    %v1076 = vunpack.c.h.b16 %v441
    %v1077 = vunpack.c.l.b16 %v442
    %v1078 = vunpack.c.h.b16 %v442
    %v1079 = vunpack.c.l.b16 %v443
    %v1080 = vunpack.c.h.b16 %v443
    %v1081 = vunpack.c.l.b16 %v444
    %v1082 = vunpack.c.h.b16 %v444
    %v1083 = vunpack.c.l.b16 %v445
    %v1084 = vunpack.c.h.b16 %v445
    %v1085 = vunpack.c.l.b16 %v446
    %v1086 = vunpack.c.h.b16 %v446
    %v1087 = vunpack.c.l.b16 %v447
    %v1088 = vunpack.c.h.b16 %v447
    %v1089 = vunpack.c.l.b16 %v448
    %v1090 = vunpack.c.h.b16 %v448
    %v1091 = vunpack.c.l.b16 %v449
    %v1092 = vunpack.c.h.b16 %v449
    %v1093 = vunpack.c.l.b16 %v450
    %v1094 = vunpack.c.h.b16 %v450
    %v1095 = vunpack.c.l.b16 %v451
    %v1096 = vunpack.c.h.b16 %v451
    %v1097 = vunpack.c.l.b16 %v452
    %v1098 = vunpack.c.h.b16 %v452
    %v1099 = vunpack.c.l.b16 %v453
    %v1100 = vunpack.c.h.b16 %v453
    %v1101 = vunpack.c.l.b16 %v454
    %v1102 = vunpack.c.h.b16 %v454
    %v1103 = vunpack.c.l.b16 %v455
    %v1104 = vunpack.c.h.b16 %v455
    %v1105 = vunpack.c.l.b16 %v456
    %v1106 = vunpack.c.h.b16 %v456
    %v1107 = vunpack.c.l.b16 %v457
    %v1108 = vunpack.c.h.b16 %v457
    %v1109 = vunpack.c.l.b16 %v458
    %v1110 = vunpack.c.h.b16 %v458
    %v1111 = vunpack.c.l.b16 %v459
    %v1112 = vunpack.c.h.b16 %v459
    %v1113 = vunpack.c.l.b16 %v460
    %v1114 = vunpack.c.h.b16 %v460
    %v1115 = vunpack.c.l.b16 %v461
    %v1116 = vunpack.c.h.b16 %v461
    %v1117 = vunpack.c.l.b16 %v462
    %v1118 = vunpack.c.h.b16 %v462
    %v1119 = vunpack.c.l.b16 %v463
    %v1120 = vunpack.c.h.b16 %v463
    %v1121 = vunpack.c.l.b16 %v464
    %v1122 = vunpack.c.h.b16 %v464
    %v1123 = vunpack.c.l.b16 %v465
    %v1124 = vunpack.c.h.b16 %v465
    %v1125 = vunpack.c.l.b16 %v466
    %v1126 = vunpack.c.h.b16 %v466
    %v1127 = vunpack.c.l.b16 %v467
    %v1128 = vunpack.c.h.b16 %v467
    %v1129 = vunpack.c.l.b16 %v468
    %v1130 = vunpack.c.h.b16 %v468
    %v1131 = vunpack.c.l.b16 %v469
    %v1132 = vunpack.c.h.b16 %v469
    %v1133 = vunpack.c.l.b16 %v470
    %v1134 = vunpack.c.h.b16 %v470
    %v1135 = vunpack.c.l.b16 %v471
    %v1136 = vunpack.c.h.b16 %v471
    %v1137 = vunpack.c.l.b16 %v472
    %v1138 = vunpack.c.h.b16 %v472
    %v1139 = vunpack.c.l.b16 %v473
    %v1140 = vunpack.c.h.b16 %v473
    %v1141 = vunpack.c.l.b16 %v474
    %v1142 = vunpack.c.h.b16 %v474
    %v1143 = vunpack.c.l.b16 %v475
    %v1144 = vunpack.c.h.b16 %v475
    %v1145 = vunpack.c.l.b16 %v476
    %v1146 = vunpack.c.h.b16 %v476
    %v1147 = vunpack.c.l.b16 %v477
    %v1148 = vunpack.c.h.b16 %v477
    %v1149 = vunpack.c.l.b16 %v478
    %v1150 = vunpack.c.h.b16 %v478
    %v1151 = vunpack.c.l.b16 %v479
    %v1152 = vunpack.c.h.b16 %v479
    %v1153 = vunpack.c.l.b16 %v480
    %v1154 = vunpack.c.h.b16 %v480
    %v1155 = vunpack.c.l.b16 %v481
    %v1156 = vunpack.c.h.b16 %v481
    %v1157 = vunpack.c.l.b16 %v482
    %v1158 = vunpack.c.h.b16 %v482
    %v1159 = vunpack.c.l.b16 %v483
    %v1160 = vunpack.c.h.b16 %v483
    %v1161 = vunpack.c.l.b16 %v484
    %v1162 = vunpack.c.h.b16 %v484
    %v1163 = vunpack.c.l.b16 %v485
    %v1164 = vunpack.c.h.b16 %v485
    %v1165 = vunpack.c.l.b16 %v486
    %v1166 = vunpack.c.h.b16 %v486
    %v1167 = vunpack.c.l.b16 %v487
    %v1168 = vunpack.c.h.b16 %v487
    %v1169 = vunpack.c.l.b16 %v488
    %v1170 = vunpack.c.h.b16 %v488
    %v1171 = vunpack.c.l.b16 %v489
    %v1172 = vunpack.c.h.b16 %v489
    %v1173 = vunpack.c.l.b16 %v490
    %v1174 = vunpack.c.h.b16 %v490
    %v1175 = vunpack.c.l.b16 %v491
    %v1176 = vunpack.c.h.b16 %v491
    %v1177 = vunpack.c.l.b16 %v492
    %v1178 = vunpack.c.h.b16 %v492
    %v1179 = vunpack.c.l.b16 %v493
    %v1180 = vunpack.c.h.b16 %v493
    %v1181 = vunpack.c.l.b16 %v494
    %v1182 = vunpack.c.h.b16 %v494
    %v1183 = vunpack.c.l.b16 %v495
    %v1184 = vunpack.c.h.b16 %v495
    %v1185 = vunpack.c.l.b16 %v496
    %v1186 = vunpack.c.h.b16 %v496
    %v1187 = vunpack.c.l.b16 %v497
    %v1188 = vunpack.c.h.b16 %v497
    %v1189 = vunpack.c.l.b16 %v498
    %v1190 = vunpack.c.h.b16 %v498
    %v1191 = vunpack.c.l.b16 %v499
    %v1192 = vunpack.c.h.b16 %v499
    %v1193 = vunpack.c.l.b16 %v500
    %v1194 = vunpack.c.h.b16 %v500
    %v1195 = vunpack.c.l.b16 %v501
    %v1196 = vunpack.c.h.b16 %v501
    %v1197 = vunpack.c.l.b16 %v502
    %v1198 = vunpack.c.h.b16 %v502
    %v1199 = vunpack.c.l.b16 %v503
    %v1200 = vunpack.c.h.b16 %v503
    %v1201 = vunpack.c.l.b16 %v504
    %v1202 = vunpack.c.h.b16 %v504
    %v1203 = vunpack.c.l.b16 %v505
    %v1204 = vunpack.c.h.b16 %v505
    %v1205 = vunpack.c.l.b16 %v506
    %v1206 = vunpack.c.h.b16 %v506
    %v1207 = vunpack.c.l.b16 %v507
    %v1208 = vunpack.c.h.b16 %v507
    %v1209 = vunpack.c.l.b16 %v508
    %v1210 = vunpack.c.h.b16 %v508
    %v1211 = vunpack.c.l.b16 %v509
    %v1212 = vunpack.c.h.b16 %v509
    %v1213 = vunpack.c.l.b16 %v510
    %v1214 = vunpack.c.h.b16 %v510
    %v1215 = vunpack.c.l.b16 %v511
    %v1216 = vunpack.c.h.b16 %v511
    %v1217 = vunpack.c.l.b16 %v512
    %v1218 = vunpack.c.h.b16 %v512
    %v1219 = vunpack.c.l.b16 %v513
    %v1220 = vunpack.c.h.b16 %v513
    %v1221 = vunpack.c.l.b16 %v514
    %v1222 = vunpack.c.h.b16 %v514
    %v1223 = vunpack.c.l.b16 %v515
    %v1224 = vunpack.c.h.b16 %v515
    %v1225 = vunpack.c.l.b16 %v516
    %v1226 = vunpack.c.h.b16 %v516
    %v1227 = vunpack.c.l.b16 %v517
    %v1228 = vunpack.c.h.b16 %v517
    %v1229 = vunpack.c.l.b16 %v518
    %v1230 = vunpack.c.h.b16 %v518
    %v1231 = vunpack.c.l.b16 %v519
    %v1232 = vunpack.c.h.b16 %v519
    %v1233 = vunpack.c.l.b16 %v520
    %v1234 = vunpack.c.h.b16 %v520
    %v1235 = vunpack.c.l.b16 %v521
    %v1236 = vunpack.c.h.b16 %v521
    %v1237 = vunpack.c.l.b16 %v522
    %v1238 = vunpack.c.h.b16 %v522
    %v1239 = vunpack.c.l.b16 %v523
    %v1240 = vunpack.c.h.b16 %v523
    %v1241 = vunpack.c.l.b16 %v524
    %v1242 = vunpack.c.h.b16 %v524
    %v1243 = vunpack.c.l.b16 %v525
    %v1244 = vunpack.c.h.b16 %v525
    %v1245 = vunpack.c.l.b16 %v526
    %v1246 = vunpack.c.h.b16 %v526
    %v1247 = vunpack.c.l.b16 %v527
    %v1248 = vunpack.c.h.b16 %v527
    %v1249 = vunpack.c.l.b16 %v528
    %v1250 = vunpack.c.h.b16 %v528
    %v1251 = vunpack.c.l.b16 %v529
    %v1252 = vunpack.c.h.b16 %v529
    %v1253 = vunpack.c.l.b16 %v530
    %v1254 = vunpack.c.h.b16 %v530
    %v1255 = vunpack.c.l.b16 %v531
    %v1256 = vunpack.c.h.b16 %v531
    %v1257 = vunpack.c.l.b16 %v532
    %v1258 = vunpack.c.h.b16 %v532
    %v1259 = vunpack.c.l.b16 %v533
    %v1260 = vunpack.c.h.b16 %v533
    %v1261 = vunpack.c.l.b16 %v534
    %v1262 = vunpack.c.h.b16 %v534
    %v1263 = vunpack.c.l.b16 %v535
    %v1264 = vunpack.c.h.b16 %v535
    %v1265 = vunpack.c.l.b16 %v536
    %v1266 = vunpack.c.h.b16 %v536
    %v1267 = vunpack.c.l.b16 %v537
    %v1268 = vunpack.c.h.b16 %v537
    %v1269 = vunpack.c.l.b16 %v538
    %v1270 = vunpack.c.h.b16 %v538
    %v1271 = vunpack.c.l.b16 %v539
    %v1272 = vunpack.c.h.b16 %v539
    %v1273 = vunpack.c.l.b16 %v540
    %v1274 = vunpack.c.h.b16 %v540
    %v1275 = vunpack.c.l.b16 %v541
    %v1276 = vunpack.c.h.b16 %v541
    %v1277 = vunpack.c.l.b16 %v542
    %v1278 = vunpack.c.h.b16 %v542
    %v1279 = vunpack.c.l.b16 %v543
    %v1280 = vunpack.c.h.b16 %v543
    %v1281 = vunpack.c.l.b16 %v544
    %v1282 = vunpack.c.h.b16 %v544
    %v1283 = vunpack.c.l.b16 %v545
    %v1284 = vunpack.c.h.b16 %v545
    %v1285 = vunpack.c.l.b16 %v546
    %v1286 = vunpack.c.h.b16 %v546
    %v1287 = vunpack.c.l.b16 %v547
    %v1288 = vunpack.c.h.b16 %v547
    %v1289 = vunpack.c.l.b16 %v548
    %v1290 = vunpack.c.h.b16 %v548
    %v1291 = vunpack.c.l.b16 %v549
    %v1292 = vunpack.c.h.b16 %v549
    %v1293 = vunpack.c.l.b16 %v550
    %v1294 = vunpack.c.h.b16 %v550
    %v1295 = vunpack.c.l.b16 %v551
    %v1296 = vunpack.c.h.b16 %v551
    %v1297 = vunpack.c.l.b16 %v552
    %v1298 = vunpack.c.h.b16 %v552
    %v1299 = vunpack.c.l.b16 %v553
    %v1300 = vunpack.c.h.b16 %v553
    %v1301 = vunpack.c.l.b16 %v554
    %v1302 = vunpack.c.h.b16 %v554
    %v1303 = vunpack.c.l.b16 %v555
    %v1304 = vunpack.c.h.b16 %v555
    %v1305 = vunpack.c.l.b16 %v556
    %v1306 = vunpack.c.h.b16 %v556
    %v1307 = vunpack.c.l.b16 %v557
    %v1308 = vunpack.c.h.b16 %v557
    %v1309 = vunpack.c.l.b16 %v558
    %v1310 = vunpack.c.h.b16 %v558
    %v1311 = vunpack.c.l.b16 %v559
    %v1312 = vunpack.c.h.b16 %v559
    %v1313 = vunpack.c.l.b16 %v560
    %v1314 = vunpack.c.h.b16 %v560
    %v1315 = vunpack.c.l.b16 %v561
    %v1316 = vunpack.c.h.b16 %v561
    %v1317 = vunpack.c.l.b16 %v562
    %v1318 = vunpack.c.h.b16 %v562
    %v1319 = vunpack.c.l.b16 %v563
    %v1320 = vunpack.c.h.b16 %v563
    %v1321 = vunpack.c.l.b16 %v564
    %v1322 = vunpack.c.h.b16 %v564
    %v1323 = vunpack.c.l.b16 %v565
    %v1324 = vunpack.c.h.b16 %v565
    %v1325 = vunpack.c.l.b16 %v566
    %v1326 = vunpack.c.h.b16 %v566
    %v1327 = vunpack.c.l.b16 %v567
    %v1328 = vunpack.c.h.b16 %v567
    %v1329 = vunpack.c.l.b16 %v568
    %v1330 = vunpack.c.h.b16 %v568
    %v1331 = vunpack.c.l.b16 %v569
    %v1332 = vunpack.c.h.b16 %v569
    %v1333 = vunpack.c.l.b16 %v570
    %v1334 = vunpack.c.h.b16 %v570
    %v1335 = vunpack.c.l.b16 %v571
    %v1336 = vunpack.c.h.b16 %v571
    %v1337 = vunpack.c.l.b16 %v572
    %v1338 = vunpack.c.h.b16 %v572
    %v1339 = vunpack.c.l.b16 %v573
    %v1340 = vunpack.c.h.b16 %v573
    %v1341 = vunpack.c.l.b16 %v574
    %v1342 = vunpack.c.h.b16 %v574
    %v1343 = vunpack.c.l.b16 %v575
    %v1344 = vunpack.c.h.b16 %v575
    %v1345 = vunpack.c.l.b16 %v576
    %v1346 = vunpack.c.h.b16 %v576
    %v1347 = vunpack.c.l.b16 %v577
    %v1348 = vunpack.c.h.b16 %v577
    %v1349 = vunpack.c.l.b16 %v578
    %v1350 = vunpack.c.h.b16 %v578
    %v1351 = vunpack.c.l.b16 %v579
    %v1352 = vunpack.c.h.b16 %v579
    %v1353 = vunpack.c.l.b16 %v580
    %v1354 = vunpack.c.h.b16 %v580
    %v1355 = vunpack.c.l.b16 %v581
    %v1356 = vunpack.c.h.b16 %v581
    %v1357 = vunpack.c.l.b16 %v582
    %v1358 = vunpack.c.h.b16 %v582
    %v1359 = vunpack.c.l.b16 %v583
    %v1360 = vunpack.c.h.b16 %v583
    %v1361 = vunpack.c.l.b16 %v584
    %v1362 = vunpack.c.h.b16 %v584
    %v1363 = vunpack.c.l.b16 %v585
    %v1364 = vunpack.c.h.b16 %v585
    %v1365 = vunpack.c.l.b16 %v586
    %v1366 = vunpack.c.h.b16 %v586
    %v1367 = vunpack.c.l.b16 %v587
    %v1368 = vunpack.c.h.b16 %v587
    %v1369 = vunpack.c.l.b16 %v588
    %v1370 = vunpack.c.h.b16 %v588
    %v1371 = vunpack.c.l.b16 %v589
    %v1372 = vunpack.c.h.b16 %v589
    %v1373 = vunpack.c.l.b16 %v590
    %v1374 = vunpack.c.h.b16 %v590
    %v1375 = vunpack.c.l.b16 %v591
    %v1376 = vunpack.c.h.b16 %v591
    %v1377 = vunpack.c.l.b16 %v592
    %v1378 = vunpack.c.h.b16 %v592
    %v1379 = vunpack.c.l.b16 %v593
    %v1380 = vunpack.c.h.b16 %v593
    %v1381 = vunpack.c.l.b16 %v594
    %v1382 = vunpack.c.h.b16 %v594
    %v1383 = vunpack.c.l.b16 %v595
    %v1384 = vunpack.c.h.b16 %v595
    %v1385 = vunpack.c.l.b16 %v596
    %v1386 = vunpack.c.h.b16 %v596
    %v1387 = vunpack.c.l.b16 %v597
    %v1388 = vunpack.c.h.b16 %v597
    %v1389 = vunpack.c.l.b16 %v598
    %v1390 = vunpack.c.h.b16 %v598
    %v1391 = vunpack.c.l.b16 %v599
    %v1392 = vunpack.c.h.b16 %v599
    %v1393 = vunpack.c.l.b16 %v600
    %v1394 = vunpack.c.h.b16 %v600
    %v1395 = vunpack.c.l.b16 %v601
    %v1396 = vunpack.c.h.b16 %v601
    %v1397 = vunpack.c.l.b16 %v602
    %v1398 = vunpack.c.h.b16 %v602
    %v1399 = vunpack.c.l.b16 %v603
    %v1400 = vunpack.c.h.b16 %v603
    %v1401 = vunpack.c.l.b16 %v604
    %v1402 = vunpack.c.h.b16 %v604
    %v1403 = vunpack.c.l.b16 %v605
    %v1404 = vunpack.c.h.b16 %v605
    %v1405 = vunpack.c.l.b16 %v606
    %v1406 = vunpack.c.h.b16 %v606
    %v1407 = vunpack.c.l.b16 %v607
    %v1408 = vunpack.c.h.b16 %v607
    %v1409 = vunpack.c.l.b16 %v608
    %v1410 = vunpack.c.h.b16 %v608
    %v1411 = vunpack.c.l.b16 %v609
    %v1412 = vunpack.c.h.b16 %v609
    %v1413 = vunpack.c.l.b16 %v610
    %v1414 = vunpack.c.h.b16 %v610
    %v1415 = vunpack.c.l.b16 %v611
    %v1416 = vunpack.c.h.b16 %v611
    %v1417 = vunpack.c.l.b16 %v612
    %v1418 = vunpack.c.h.b16 %v612
    %v1419 = vunpack.c.l.b16 %v613
    %v1420 = vunpack.c.h.b16 %v613
    %v1421 = vunpack.c.l.b16 %v614
    %v1422 = vunpack.c.h.b16 %v614
    %v1423 = vunpack.c.l.b16 %v615
    %v1424 = vunpack.c.h.b16 %v615
    %v1425 = vunpack.c.l.b16 %v616
    %v1426 = vunpack.c.h.b16 %v616
    %v1427 = vpack.c.b16 %v923, %v915
    %v1428 = vpack.c.b16 %v924, %v916
    %v1429 = vpack.c.b16 %v925, %v917
    %v1430 = vpack.c.b16 %v926, %v918
    %v1431 = vpack.c.b16 %v927, %v919
    %v1432 = vpack.c.b16 %v928, %v920
    %v1433 = vpack.c.b16 %v929, %v921
    %v1434 = vpack.c.b16 %v930, %v922
    %v1435 = vpack.c.b16 %v939, %v931
    %v1436 = vpack.c.b16 %v940, %v932
    %v1437 = vpack.c.b16 %v941, %v933
    %v1438 = vpack.c.b16 %v942, %v934
    %v1439 = vpack.c.b16 %v943, %v935
    %v1440 = vpack.c.b16 %v944, %v936
    %v1441 = vpack.c.b16 %v945, %v937
    %v1442 = vpack.c.b16 %v946, %v938
    %v1443 = vpack.c.b16 %v955, %v947
    %v1444 = vpack.c.b16 %v956, %v948
    %v1445 = vpack.c.b16 %v957, %v949
    %v1446 = vpack.c.b16 %v958, %v950
    %v1447 = vpack.c.b16 %v959, %v951
    %v1448 = vpack.c.b16 %v960, %v952
    %v1449 = vpack.c.b16 %v961, %v953
    %v1450 = vpack.c.b16 %v962, %v954
    %v1451 = vpack.c.b16 %v971, %v963
    %v1452 = vpack.c.b16 %v972, %v964
    %v1453 = vpack.c.b16 %v973, %v965
    %v1454 = vpack.c.b16 %v974, %v966
    %v1455 = vpack.c.b16 %v975, %v967
    %v1456 = vpack.c.b16 %v976, %v968
    %v1457 = vpack.c.b16 %v977, %v969
    %v1458 = vpack.c.b16 %v978, %v970
    %v1459 = vpack.c.b16 %v987, %v979
    %v1460 = vpack.c.b16 %v988, %v980
    %v1461 = vpack.c.b16 %v989, %v981
    %v1462 = vpack.c.b16 %v990, %v982
    %v1463 = vpack.c.b16 %v991, %v983
    %v1464 = vpack.c.b16 %v992, %v984
    %v1465 = vpack.c.b16 %v993, %v985
    %v1466 = vpack.c.b16 %v994, %v986
    %v1467 = vpack.c.b16 %v1003, %v995
    %v1468 = vpack.c.b16 %v1004, %v996
    %v1469 = vpack.c.b16 %v1005, %v997
    %v1470 = vpack.c.b16 %v1006, %v998
    %v1471 = vpack.c.b16 %v1007, %v999
    %v1472 = vpack.c.b16 %v1008, %v1000
    %v1473 = vpack.c.b16 %v1009, %v1001
    %v1474 = vpack.c.b16 %v1010, %v1002
    %v1475 = vpack.c.b16 %v1019, %v1011
    %v1476 = vpack.c.b16 %v1020, %v1012
    %v1477 = vpack.c.b16 %v1021, %v1013
    %v1478 = vpack.c.b16 %v1022, %v1014
    %v1479 = vpack.c.b16 %v1023, %v1015
    %v1480 = vpack.c.b16 %v1024, %v1016
    %v1481 = vpack.c.b16 %v1025, %v1017
    %v1482 = vpack.c.b16 %v1026, %v1018
    %v1483 = vpack.c.b16 %v1035, %v1027
    %v1484 = vpack.c.b16 %v1036, %v1028
    %v1485 = vpack.c.b16 %v1037, %v1029
    %v1486 = vpack.c.b16 %v1038, %v1030
    %v1487 = vpack.c.b16 %v1039, %v1031
    %v1488 = vpack.c.b16 %v1040, %v1032
    %v1489 = vpack.c.b16 %v1041, %v1033
    %v1490 = vpack.c.b16 %v1042, %v1034
    %v1491 = vpack.c.b16 %v1051, %v1043
    %v1492 = vpack.c.b16 %v1052, %v1044
    %v1493 = vpack.c.b16 %v1053, %v1045
    %v1494 = vpack.c.b16 %v1054, %v1046
    %v1495 = vpack.c.b16 %v1055, %v1047
    %v1496 = vpack.c.b16 %v1056, %v1048
    %v1497 = vpack.c.b16 %v1057, %v1049
    %v1498 = vpack.c.b16 %v1058, %v1050
    %v1499 = vpack.c.b16 %v1067, %v1059
    %v1500 = vpack.c.b16 %v1068, %v1060
    %v1501 = vpack.c.b16 %v1069, %v1061
    %v1502 = vpack.c.b16 %v1070, %v1062
    %v1503 = vpack.c.b16 %v1071, %v1063
    %v1504 = vpack.c.b16 %v1072, %v1064
    %v1505 = vpack.c.b16 %v1073, %v1065
    %v1506 = vpack.c.b16 %v1074, %v1066
    %v1507 = vpack.c.b16 %v1083, %v1075
    %v1508 = vpack.c.b16 %v1084, %v1076
    %v1509 = vpack.c.b16 %v1085, %v1077
    %v1510 = vpack.c.b16 %v1086, %v1078
    %v1511 = vpack.c.b16 %v1087, %v1079
    %v1512 = vpack.c.b16 %v1088, %v1080
    %v1513 = vpack.c.b16 %v1089, %v1081
    %v1514 = vpack.c.b16 %v1090, %v1082
    %v1515 = vpack.c.b16 %v1099, %v1091
    %v1516 = vpack.c.b16 %v1100, %v1092
    %v1517 = vpack.c.b16 %v1101, %v1093
    %v1518 = vpack.c.b16 %v1102, %v1094
    %v1519 = vpack.c.b16 %v1103, %v1095
    %v1520 = vpack.c.b16 %v1104, %v1096
    %v1521 = vpack.c.b16 %v1105, %v1097
    %v1522 = vpack.c.b16 %v1106, %v1098
    %v1523 = vpack.c.b16 %v1115, %v1107
    %v1524 = vpack.c.b16 %v1116, %v1108
    %v1525 = vpack.c.b16 %v1117, %v1109
    %v1526 = vpack.c.b16 %v1118, %v1110
    %v1527 = vpack.c.b16 %v1119, %v1111
    %v1528 = vpack.c.b16 %v1120, %v1112
    %v1529 = vpack.c.b16 %v1121, %v1113
    %v1530 = vpack.c.b16 %v1122, %v1114
    %v1531 = vpack.c.b16 %v1131, %v1123
    %v1532 = vpack.c.b16 %v1132, %v1124
    %v1533 = vpack.c.b16 %v1133, %v1125
    %v1534 = vpack.c.b16 %v1134, %v1126
    %v1535 = vpack.c.b16 %v1135, %v1127
    %v1536 = vpack.c.b16 %v1136, %v1128
    %v1537 = vpack.c.b16 %v1137, %v1129
    %v1538 = vpack.c.b16 %v1138, %v1130
    %v1539 = vpack.c.b16 %v1147, %v1139
    %v1540 = vpack.c.b16 %v1148, %v1140
    %v1541 = vpack.c.b16 %v1149, %v1141
    %v1542 = vpack.c.b16 %v1150, %v1142
    %v1543 = vpack.c.b16 %v1151, %v1143
    %v1544 = vpack.c.b16 %v1152, %v1144
    %v1545 = vpack.c.b16 %v1153, %v1145
    %v1546 = vpack.c.b16 %v1154, %v1146
    %v1547 = vpack.c.b16 %v1163, %v1155
    %v1548 = vpack.c.b16 %v1164, %v1156
    %v1549 = vpack.c.b16 %v1165, %v1157
    %v1550 = vpack.c.b16 %v1166, %v1158
    %v1551 = vpack.c.b16 %v1167, %v1159
    %v1552 = vpack.c.b16 %v1168, %v1160
    %v1553 = vpack.c.b16 %v1169, %v1161
    %v1554 = vpack.c.b16 %v1170, %v1162
    %v1555 = vpack.c.b16 %v1179, %v1171
    %v1556 = vpack.c.b16 %v1180, %v1172
    %v1557 = vpack.c.b16 %v1181, %v1173
    %v1558 = vpack.c.b16 %v1182, %v1174
    %v1559 = vpack.c.b16 %v1183, %v1175
    %v1560 = vpack.c.b16 %v1184, %v1176
    %v1561 = vpack.c.b16 %v1185, %v1177
    %v1562 = vpack.c.b16 %v1186, %v1178
    %v1563 = vpack.c.b16 %v1195, %v1187
    %v1564 = vpack.c.b16 %v1196, %v1188
    %v1565 = vpack.c.b16 %v1197, %v1189
    %v1566 = vpack.c.b16 %v1198, %v1190
    %v1567 = vpack.c.b16 %v1199, %v1191
    %v1568 = vpack.c.b16 %v1200, %v1192
    %v1569 = vpack.c.b16 %v1201, %v1193
    %v1570 = vpack.c.b16 %v1202, %v1194
    %v1571 = vpack.c.b16 %v1211, %v1203
    %v1572 = vpack.c.b16 %v1212, %v1204
    %v1573 = vpack.c.b16 %v1213, %v1205
    %v1574 = vpack.c.b16 %v1214, %v1206
    %v1575 = vpack.c.b16 %v1215, %v1207
    %v1576 = vpack.c.b16 %v1216, %v1208
    %v1577 = vpack.c.b16 %v1217, %v1209
    %v1578 = vpack.c.b16 %v1218, %v1210
    %v1579 = vpack.c.b16 %v1227, %v1219
    %v1580 = vpack.c.b16 %v1228, %v1220
    %v1581 = vpack.c.b16 %v1229, %v1221
    %v1582 = vpack.c.b16 %v1230, %v1222
    %v1583 = vpack.c.b16 %v1231, %v1223
    %v1584 = vpack.c.b16 %v1232, %v1224
    %v1585 = vpack.c.b16 %v1233, %v1225
    %v1586 = vpack.c.b16 %v1234, %v1226
    %v1587 = vpack.c.b16 %v1243, %v1235
    %v1588 = vpack.c.b16 %v1244, %v1236
    %v1589 = vpack.c.b16 %v1245, %v1237
    %v1590 = vpack.c.b16 %v1246, %v1238
    %v1591 = vpack.c.b16 %v1247, %v1239
    %v1592 = vpack.c.b16 %v1248, %v1240
    %v1593 = vpack.c.b16 %v1249, %v1241
    %v1594 = vpack.c.b16 %v1250, %v1242
    %v1595 = vpack.c.b16 %v1259, %v1251
    %v1596 = vpack.c.b16 %v1260, %v1252
    %v1597 = vpack.c.b16 %v1261, %v1253
    %v1598 = vpack.c.b16 %v1262, %v1254
    %v1599 = vpack.c.b16 %v1263, %v1255
    %v1600 = vpack.c.b16 %v1264, %v1256
    %v1601 = vpack.c.b16 %v1265, %v1257
    %v1602 = vpack.c.b16 %v1266, %v1258
    %v1603 = vpack.c.b16 %v1275, %v1267
    %v1604 = vpack.c.b16 %v1276, %v1268
    %v1605 = vpack.c.b16 %v1277, %v1269
    %v1606 = vpack.c.b16 %v1278, %v1270
    %v1607 = vpack.c.b16 %v1279, %v1271
    %v1608 = vpack.c.b16 %v1280, %v1272
    %v1609 = vpack.c.b16 %v1281, %v1273
    %v1610 = vpack.c.b16 %v1282, %v1274
    %v1611 = vpack.c.b16 %v1291, %v1283
    %v1612 = vpack.c.b16 %v1292, %v1284
    %v1613 = vpack.c.b16 %v1293, %v1285
    %v1614 = vpack.c.b16 %v1294, %v1286
    %v1615 = vpack.c.b16 %v1295, %v1287
    %v1616 = vpack.c.b16 %v1296, %v1288
    %v1617 = vpack.c.b16 %v1297, %v1289
    %v1618 = vpack.c.b16 %v1298, %v1290
    %v1619 = vpack.c.b16 %v1307, %v1299
    %v1620 = vpack.c.b16 %v1308, %v1300
    %v1621 = vpack.c.b16 %v1309, %v1301
    %v1622 = vpack.c.b16 %v1310, %v1302
    %v1623 = vpack.c.b16 %v1311, %v1303
    %v1624 = vpack.c.b16 %v1312, %v1304
    %v1625 = vpack.c.b16 %v1313, %v1305
    %v1626 = vpack.c.b16 %v1314, %v1306
    %v1627 = vpack.c.b16 %v1323, %v1315
    %v1628 = vpack.c.b16 %v1324, %v1316
    %v1629 = vpack.c.b16 %v1325, %v1317
    %v1630 = vpack.c.b16 %v1326, %v1318
    %v1631 = vpack.c.b16 %v1327, %v1319
    %v1632 = vpack.c.b16 %v1328, %v1320
    %v1633 = vpack.c.b16 %v1329, %v1321
    %v1634 = vpack.c.b16 %v1330, %v1322
    %v1635 = vpack.c.b16 %v1339, %v1331
    %v1636 = vpack.c.b16 %v1340, %v1332
    %v1637 = vpack.c.b16 %v1341, %v1333
    %v1638 = vpack.c.b16 %v1342, %v1334
    %v1639 = vpack.c.b16 %v1343, %v1335
    %v1640 = vpack.c.b16 %v1344, %v1336
    %v1641 = vpack.c.b16 %v1345, %v1337
    %v1642 = vpack.c.b16 %v1346, %v1338
    %v1643 = vpack.c.b16 %v1355, %v1347
    %v1644 = vpack.c.b16 %v1356, %v1348
    %v1645 = vpack.c.b16 %v1357, %v1349
    %v1646 = vpack.c.b16 %v1358, %v1350
    %v1647 = vpack.c.b16 %v1359, %v1351
    %v1648 = vpack.c.b16 %v1360, %v1352
    %v1649 = vpack.c.b16 %v1361, %v1353
    %v1650 = vpack.c.b16 %v1362, %v1354
    %v1651 = vpack.c.b16 %v1371, %v1363
    %v1652 = vpack.c.b16 %v1372, %v1364
    %v1653 = vpack.c.b16 %v1373, %v1365
    %v1654 = vpack.c.b16 %v1374, %v1366
    %v1655 = vpack.c.b16 %v1375, %v1367
    %v1656 = vpack.c.b16 %v1376, %v1368
    %v1657 = vpack.c.b16 %v1377, %v1369
    %v1658 = vpack.c.b16 %v1378, %v1370
    %v1659 = vpack.c.b16 %v1387, %v1379
    %v1660 = vpack.c.b16 %v1388, %v1380
    %v1661 = vpack.c.b16 %v1389, %v1381
    %v1662 = vpack.c.b16 %v1390, %v1382
    %v1663 = vpack.c.b16 %v1391, %v1383
    %v1664 = vpack.c.b16 %v1392, %v1384
    %v1665 = vpack.c.b16 %v1393, %v1385
    %v1666 = vpack.c.b16 %v1394, %v1386
    %v1667 = vpack.c.b16 %v1403, %v1395
    %v1668 = vpack.c.b16 %v1404, %v1396
    %v1669 = vpack.c.b16 %v1405, %v1397
    %v1670 = vpack.c.b16 %v1406, %v1398
    %v1671 = vpack.c.b16 %v1407, %v1399
    %v1672 = vpack.c.b16 %v1408, %v1400
    %v1673 = vpack.c.b16 %v1409, %v1401
    %v1674 = vpack.c.b16 %v1410, %v1402
    %v1675 = vpack.c.b16 %v1419, %v1411
    %v1676 = vpack.c.b16 %v1420, %v1412
    %v1677 = vpack.c.b16 %v1421, %v1413
    %v1678 = vpack.c.b16 %v1422, %v1414
    %v1679 = vpack.c.b16 %v1423, %v1415
    %v1680 = vpack.c.b16 %v1424, %v1416
    %v1681 = vpack.c.b16 %v1425, %v1417
    %v1682 = vpack.c.b16 %v1426, %v1418
    %1939 = vmatprep.subr.bf16.mxu0 %v1428
    %1940 = vmatpush1.bf16.msra.mxu0 %v1427
    %1941 = vmatprep.subr.bf16.mxu0 %v1436
    %1942 = vmatpush1.bf16.msra.mxu0 %v1435
    %1943 = vmatprep.subr.bf16.mxu0 %v1444
    %1944 = vmatpush1.bf16.msra.mxu0 %v1443
    %1945 = vmatprep.subr.bf16.mxu0 %v1452
    %1946 = vmatpush1.bf16.msra.mxu0 %v1451
    %1947 = vmatprep.subr.bf16.mxu0 %v1460
    %1948 = vmatpush1.bf16.msra.mxu0 %v1459
    %1949 = vmatprep.subr.bf16.mxu0 %v1468
    %1950 = vmatpush1.bf16.msra.mxu0 %v1467
    %1951 = vmatprep.subr.bf16.mxu0 %v1476
    %1952 = vmatpush1.bf16.msra.mxu0 %v1475
    %1953 = vmatprep.subr.bf16.mxu0 %v1484
    %1954 = vmatpush1.bf16.msra.mxu0 %v1483
    %1955 = vmatprep.subr.bf16.mxu0 %v1492
    %1956 = vmatpush1.bf16.msra.mxu0 %v1491
    %1957 = vmatprep.subr.bf16.mxu0 %v1500
    %1958 = vmatpush1.bf16.msra.mxu0 %v1499
    %1959 = vmatprep.subr.bf16.mxu0 %v1508
    %1960 = vmatpush1.bf16.msra.mxu0 %v1507
    %1961 = vmatprep.subr.bf16.mxu0 %v1516
    %1962 = vmatpush1.bf16.msra.mxu0 %v1515
    %1963 = vmatprep.subr.bf16.mxu0 %v1524
    %1964 = vmatpush1.bf16.msra.mxu0 %v1523
    %1965 = vmatprep.subr.bf16.mxu0 %v1532
    %1966 = vmatpush1.bf16.msra.mxu0 %v1531
    %1967 = vmatprep.subr.bf16.mxu0 %v1540
    %1968 = vmatpush1.bf16.msra.mxu0 %v1539
    %1969 = vmatprep.subr.bf16.mxu0 %v1548
    %1970 = vmatpush1.bf16.msra.mxu0 %v1547
    %1971 = vmatprep.mubr.bf16.mxu0 %v358
    %1972 = vmatmul.mubr.bf16.gmra.mrb[0].mxu0 %v357
    %v1973 = vpop.f32.mrb[0].mxu0
    %v1974 = vadd.f32 %v622, %v1973
    %v1975 = vpop.f32.mrb[0].mxu0
    %v1976 = vadd.f32 %v626, %v1975
    %v1977 = vpop.f32.mrb[0].mxu0
    %v1978 = vpop.f32.mrb[0].mxu0
    %1979 = vdwg.mxu0
    %1980 = vmatprep.subr.bf16.mxu0 %v1556
    %1981 = vmatpush1.bf16.msra.mxu0 %v1555
    %1982 = vmatprep.subr.bf16.mxu0 %v1564
    %1983 = vmatpush1.bf16.msra.mxu0 %v1563
    %1984 = vmatprep.subr.bf16.mxu0 %v1572
    %1985 = vmatpush1.bf16.msra.mxu0 %v1571
    %1986 = vmatprep.subr.bf16.mxu0 %v1580
    %1987 = vmatpush1.bf16.msra.mxu0 %v1579
    %1988 = vmatprep.subr.bf16.mxu0 %v1588
    %1989 = vmatpush1.bf16.msra.mxu0 %v1587
    %1990 = vmatprep.subr.bf16.mxu0 %v1596
    %1991 = vmatpush1.bf16.msra.mxu0 %v1595
    %1992 = vmatprep.subr.bf16.mxu0 %v1604
    %1993 = vmatpush1.bf16.msra.mxu0 %v1603
    %1994 = vmatprep.subr.bf16.mxu0 %v1612
    %1995 = vmatpush1.bf16.msra.mxu0 %v1611
    %1996 = vmatprep.subr.bf16.mxu0 %v1620
    %1997 = vmatpush1.bf16.msra.mxu0 %v1619
    %1998 = vmatprep.subr.bf16.mxu0 %v1628
    %1999 = vmatpush1.bf16.msra.mxu0 %v1627
    %2000 = vmatprep.subr.bf16.mxu0 %v1636
    %2001 = vmatpush1.bf16.msra.mxu0 %v1635
    %2002 = vmatprep.subr.bf16.mxu0 %v1644
    %2003 = vmatpush1.bf16.msra.mxu0 %v1643
    %2004 = vmatprep.subr.bf16.mxu0 %v1652
    %2005 = vmatpush1.bf16.msra.mxu0 %v1651
    %2006 = vmatprep.subr.bf16.mxu0 %v1660
    %2007 = vmatpush1.bf16.msra.mxu0 %v1659
    %2008 = vmatprep.subr.bf16.mxu0 %v1668
    %2009 = vmatpush1.bf16.msra.mxu0 %v1667
    %2010 = vmatprep.subr.bf16.mxu0 %v1676
    %2011 = vmatpush1.bf16.msra.mxu0 %v1675
    %2012 = vmatprep.mubr.bf16.mxu0 %v360
    %2013 = vmatmul.mubr.bf16.gmra.mrb[0].mxu0 %v359
    %v2014 = vpop.f32.mrb[0].mxu0
    %v2015 = vadd.f32 %v1974, %v2014
    %v2016 = vpop.f32.mrb[0].mxu0
    %v2017 = vadd.f32 %v1976, %v2016
    %v2018 = vpop.f32.mrb[0].mxu0
    %v2019 = vpop.f32.mrb[0].mxu0
    %2020 = vdwg.mxu0
    %2021 = vmatprep.subr.bf16.mxu0 %v1430
    %2022 = vmatpush1.bf16.msra.mxu0 %v1429
    %2023 = vmatprep.subr.bf16.mxu0 %v1438
    %2024 = vmatpush1.bf16.msra.mxu0 %v1437
    %2025 = vmatprep.subr.bf16.mxu0 %v1446
    %2026 = vmatpush1.bf16.msra.mxu0 %v1445
    %2027 = vmatprep.subr.bf16.mxu0 %v1454
    %2028 = vmatpush1.bf16.msra.mxu0 %v1453
    %2029 = vmatprep.subr.bf16.mxu0 %v1462
    %2030 = vmatpush1.bf16.msra.mxu0 %v1461
    %2031 = vmatprep.subr.bf16.mxu0 %v1470
    %2032 = vmatpush1.bf16.msra.mxu0 %v1469
    %2033 = vmatprep.subr.bf16.mxu0 %v1478
    %2034 = vmatpush1.bf16.msra.mxu0 %v1477
    %2035 = vmatprep.subr.bf16.mxu0 %v1486
    %2036 = vmatpush1.bf16.msra.mxu0 %v1485
    %2037 = vmatprep.subr.bf16.mxu0 %v1494
    %2038 = vmatpush1.bf16.msra.mxu0 %v1493
    %2039 = vmatprep.subr.bf16.mxu0 %v1502
    %2040 = vmatpush1.bf16.msra.mxu0 %v1501
    %2041 = vmatprep.subr.bf16.mxu0 %v1510
    %2042 = vmatpush1.bf16.msra.mxu0 %v1509
    %2043 = vmatprep.subr.bf16.mxu0 %v1518
    %2044 = vmatpush1.bf16.msra.mxu0 %v1517
    %2045 = vmatprep.subr.bf16.mxu0 %v1526
    %2046 = vmatpush1.bf16.msra.mxu0 %v1525
    %2047 = vmatprep.subr.bf16.mxu0 %v1534
    %2048 = vmatpush1.bf16.msra.mxu0 %v1533
    %2049 = vmatprep.subr.bf16.mxu0 %v1542
    %2050 = vmatpush1.bf16.msra.mxu0 %v1541
    %2051 = vmatprep.subr.bf16.mxu0 %v1550
    %2052 = vmatpush1.bf16.msra.mxu0 %v1549
    %2053 = vmatprep.mubr.bf16.mxu0 %v358
    %2054 = vmatmul.mubr.bf16.gmra.mrb[0].mxu0 %v357
    %v2055 = vpop.f32.mrb[0].mxu0
    %v2056 = vadd.f32 %v630, %v2055
    %v2057 = vpop.f32.mrb[0].mxu0
    %v2058 = vadd.f32 %v634, %v2057
    %v2059 = vpop.f32.mrb[0].mxu0
    %v2060 = vpop.f32.mrb[0].mxu0
    %2061 = vdwg.mxu0
    %2062 = vmatprep.subr.bf16.mxu0 %v1558
    %2063 = vmatpush1.bf16.msra.mxu0 %v1557
    %2064 = vmatprep.subr.bf16.mxu0 %v1566
    %2065 = vmatpush1.bf16.msra.mxu0 %v1565
    %2066 = vmatprep.subr.bf16.mxu0 %v1574
    %2067 = vmatpush1.bf16.msra.mxu0 %v1573
    %2068 = vmatprep.subr.bf16.mxu0 %v1582
    %2069 = vmatpush1.bf16.msra.mxu0 %v1581
    %2070 = vmatprep.subr.bf16.mxu0 %v1590
    %2071 = vmatpush1.bf16.msra.mxu0 %v1589
    %2072 = vmatprep.subr.bf16.mxu0 %v1598
    %2073 = vmatpush1.bf16.msra.mxu0 %v1597
    %2074 = vmatprep.subr.bf16.mxu0 %v1606
    %2075 = vmatpush1.bf16.msra.mxu0 %v1605
    %2076 = vmatprep.subr.bf16.mxu0 %v1614
    %2077 = vmatpush1.bf16.msra.mxu0 %v1613
    %2078 = vmatprep.subr.bf16.mxu0 %v1622
    %2079 = vmatpush1.bf16.msra.mxu0 %v1621
    %2080 = vmatprep.subr.bf16.mxu0 %v1630
    %2081 = vmatpush1.bf16.msra.mxu0 %v1629
    %2082 = vmatprep.subr.bf16.mxu0 %v1638
    %2083 = vmatpush1.bf16.msra.mxu0 %v1637
    %2084 = vmatprep.subr.bf16.mxu0 %v1646
    %2085 = vmatpush1.bf16.msra.mxu0 %v1645
    %2086 = vmatprep.subr.bf16.mxu0 %v1654
    %2087 = vmatpush1.bf16.msra.mxu0 %v1653
    %2088 = vmatprep.subr.bf16.mxu0 %v1662
    %2089 = vmatpush1.bf16.msra.mxu0 %v1661
    %2090 = vmatprep.subr.bf16.mxu0 %v1670
    %2091 = vmatpush1.bf16.msra.mxu0 %v1669
    %2092 = vmatprep.subr.bf16.mxu0 %v1678
    %2093 = vmatpush1.bf16.msra.mxu0 %v1677
    %2094 = vmatprep.mubr.bf16.mxu0 %v360
    %2095 = vmatmul.mubr.bf16.gmra.mrb[0].mxu0 %v359
    %v2096 = vpop.f32.mrb[0].mxu0
    %v2097 = vadd.f32 %v2056, %v2096
    %v2098 = vpop.f32.mrb[0].mxu0
    %v2099 = vadd.f32 %v2058, %v2098
    %v2100 = vpop.f32.mrb[0].mxu0
    %v2101 = vpop.f32.mrb[0].mxu0
    %2102 = vdwg.mxu0
    %2103 = vmatprep.subr.bf16.mxu0 %v1432
    %2104 = vmatpush1.bf16.msra.mxu0 %v1431
    %2105 = vmatprep.subr.bf16.mxu0 %v1440
    %2106 = vmatpush1.bf16.msra.mxu0 %v1439
    %2107 = vmatprep.subr.bf16.mxu0 %v1448
    %2108 = vmatpush1.bf16.msra.mxu0 %v1447
    %2109 = vmatprep.subr.bf16.mxu0 %v1456
    %2110 = vmatpush1.bf16.msra.mxu0 %v1455
    %2111 = vmatprep.subr.bf16.mxu0 %v1464
    %2112 = vmatpush1.bf16.msra.mxu0 %v1463
    %2113 = vmatprep.subr.bf16.mxu0 %v1472
    %2114 = vmatpush1.bf16.msra.mxu0 %v1471
    %2115 = vmatprep.subr.bf16.mxu0 %v1480
    %2116 = vmatpush1.bf16.msra.mxu0 %v1479
    %2117 = vmatprep.subr.bf16.mxu0 %v1488
    %2118 = vmatpush1.bf16.msra.mxu0 %v1487
    %2119 = vmatprep.subr.bf16.mxu0 %v1496
    %2120 = vmatpush1.bf16.msra.mxu0 %v1495
    %2121 = vmatprep.subr.bf16.mxu0 %v1504
    %2122 = vmatpush1.bf16.msra.mxu0 %v1503
    %2123 = vmatprep.subr.bf16.mxu0 %v1512
    %2124 = vmatpush1.bf16.msra.mxu0 %v1511
    %2125 = vmatprep.subr.bf16.mxu0 %v1520
    %2126 = vmatpush1.bf16.msra.mxu0 %v1519
    %2127 = vmatprep.subr.bf16.mxu0 %v1528
    %2128 = vmatpush1.bf16.msra.mxu0 %v1527
    %2129 = vmatprep.subr.bf16.mxu0 %v1536
    %2130 = vmatpush1.bf16.msra.mxu0 %v1535
    %2131 = vmatprep.subr.bf16.mxu0 %v1544
    %2132 = vmatpush1.bf16.msra.mxu0 %v1543
    %2133 = vmatprep.subr.bf16.mxu0 %v1552
    %2134 = vmatpush1.bf16.msra.mxu0 %v1551
    %2135 = vmatprep.mubr.bf16.mxu0 %v358
    %2136 = vmatmul.mubr.bf16.gmra.mrb[0].mxu0 %v357
    %v2137 = vpop.f32.mrb[0].mxu0
    %v2138 = vadd.f32 %v638, %v2137
    %v2139 = vpop.f32.mrb[0].mxu0
    %v2140 = vadd.f32 %v642, %v2139
    %v2141 = vpop.f32.mrb[0].mxu0
    %v2142 = vpop.f32.mrb[0].mxu0
    %2143 = vdwg.mxu0
    %2144 = vmatprep.subr.bf16.mxu0 %v1560
    %2145 = vmatpush1.bf16.msra.mxu0 %v1559
    %2146 = vmatprep.subr.bf16.mxu0 %v1568
    %2147 = vmatpush1.bf16.msra.mxu0 %v1567
    %2148 = vmatprep.subr.bf16.mxu0 %v1576
    %2149 = vmatpush1.bf16.msra.mxu0 %v1575
    %2150 = vmatprep.subr.bf16.mxu0 %v1584
    %2151 = vmatpush1.bf16.msra.mxu0 %v1583
    %2152 = vmatprep.subr.bf16.mxu0 %v1592
    %2153 = vmatpush1.bf16.msra.mxu0 %v1591
    %2154 = vmatprep.subr.bf16.mxu0 %v1600
    %2155 = vmatpush1.bf16.msra.mxu0 %v1599
    %2156 = vmatprep.subr.bf16.mxu0 %v1608
    %2157 = vmatpush1.bf16.msra.mxu0 %v1607
    %2158 = vmatprep.subr.bf16.mxu0 %v1616
    %2159 = vmatpush1.bf16.msra.mxu0 %v1615
    %2160 = vmatprep.subr.bf16.mxu0 %v1624
    %2161 = vmatpush1.bf16.msra.mxu0 %v1623
    %2162 = vmatprep.subr.bf16.mxu0 %v1632
    %2163 = vmatpush1.bf16.msra.mxu0 %v1631
    %2164 = vmatprep.subr.bf16.mxu0 %v1640
    %2165 = vmatpush1.bf16.msra.mxu0 %v1639
    %2166 = vmatprep.subr.bf16.mxu0 %v1648
    %2167 = vmatpush1.bf16.msra.mxu0 %v1647
    %2168 = vmatprep.subr.bf16.mxu0 %v1656
    %2169 = vmatpush1.bf16.msra.mxu0 %v1655
    %2170 = vmatprep.subr.bf16.mxu0 %v1664
    %2171 = vmatpush1.bf16.msra.mxu0 %v1663
    %2172 = vmatprep.subr.bf16.mxu0 %v1672
    %2173 = vmatpush1.bf16.msra.mxu0 %v1671
    %2174 = vmatprep.subr.bf16.mxu0 %v1680
    %2175 = vmatpush1.bf16.msra.mxu0 %v1679
    %2176 = vmatprep.mubr.bf16.mxu0 %v360
    %2177 = vmatmul.mubr.bf16.gmra.mrb[0].mxu0 %v359
    %v2178 = vpop.f32.mrb[0].mxu0
    %v2179 = vadd.f32 %v2138, %v2178
    %v2180 = vpop.f32.mrb[0].mxu0
    %v2181 = vadd.f32 %v2140, %v2180
    %v2182 = vpop.f32.mrb[0].mxu0
    %v2183 = vpop.f32.mrb[0].mxu0
    %2184 = vdwg.mxu0
    %2185 = vmatprep.subr.bf16.mxu0 %v1434
    %2186 = vmatpush1.bf16.msra.mxu0 %v1433
    %2187 = vmatprep.subr.bf16.mxu0 %v1442
    %2188 = vmatpush1.bf16.msra.mxu0 %v1441
    %2189 = vmatprep.subr.bf16.mxu0 %v1450
    %2190 = vmatpush1.bf16.msra.mxu0 %v1449
    %2191 = vmatprep.subr.bf16.mxu0 %v1458
    %2192 = vmatpush1.bf16.msra.mxu0 %v1457
    %2193 = vmatprep.subr.bf16.mxu0 %v1466
    %2194 = vmatpush1.bf16.msra.mxu0 %v1465
    %2195 = vmatprep.subr.bf16.mxu0 %v1474
    %2196 = vmatpush1.bf16.msra.mxu0 %v1473
    %2197 = vmatprep.subr.bf16.mxu0 %v1482
    %2198 = vmatpush1.bf16.msra.mxu0 %v1481
    %2199 = vmatprep.subr.bf16.mxu0 %v1490
    %2200 = vmatpush1.bf16.msra.mxu0 %v1489
    %2201 = vmatprep.subr.bf16.mxu0 %v1498
    %2202 = vmatpush1.bf16.msra.mxu0 %v1497
    %2203 = vmatprep.subr.bf16.mxu0 %v1506
    %2204 = vmatpush1.bf16.msra.mxu0 %v1505
    %2205 = vmatprep.subr.bf16.mxu0 %v1514
    %2206 = vmatpush1.bf16.msra.mxu0 %v1513
    %2207 = vmatprep.subr.bf16.mxu0 %v1522
    %2208 = vmatpush1.bf16.msra.mxu0 %v1521
    %2209 = vmatprep.subr.bf16.mxu0 %v1530
    %2210 = vmatpush1.bf16.msra.mxu0 %v1529
    %2211 = vmatprep.subr.bf16.mxu0 %v1538
    %2212 = vmatpush1.bf16.msra.mxu0 %v1537
    %2213 = vmatprep.subr.bf16.mxu0 %v1546
    %2214 = vmatpush1.bf16.msra.mxu0 %v1545
    %2215 = vmatprep.subr.bf16.mxu0 %v1554
    %2216 = vmatpush1.bf16.msra.mxu0 %v1553
    %2217 = vmatprep.mubr.bf16.mxu0 %v358
    %2218 = vmatmul.mubr.bf16.gmra.mrb[0].mxu0 %v357
    %v2219 = vpop.f32.mrb[0].mxu0
    %v2220 = vadd.f32 %v646, %v2219
    %v2221 = vpop.f32.mrb[0].mxu0
    %v2222 = vadd.f32 %v650, %v2221
    %v2223 = vpop.f32.mrb[0].mxu0
    %v2224 = vpop.f32.mrb[0].mxu0
    %2225 = vdwg.mxu0
    %2226 = vmatprep.subr.bf16.mxu0 %v1562
    %2227 = vmatpush1.bf16.msra.mxu0 %v1561
    %2228 = vmatprep.subr.bf16.mxu0 %v1570
    %2229 = vmatpush1.bf16.msra.mxu0 %v1569
    %2230 = vmatprep.subr.bf16.mxu0 %v1578
    %2231 = vmatpush1.bf16.msra.mxu0 %v1577
    %2232 = vmatprep.subr.bf16.mxu0 %v1586
    %2233 = vmatpush1.bf16.msra.mxu0 %v1585
    %2234 = vmatprep.subr.bf16.mxu0 %v1594
    %2235 = vmatpush1.bf16.msra.mxu0 %v1593
    %2236 = vmatprep.subr.bf16.mxu0 %v1602
    %2237 = vmatpush1.bf16.msra.mxu0 %v1601
    %2238 = vmatprep.subr.bf16.mxu0 %v1610
    %2239 = vmatpush1.bf16.msra.mxu0 %v1609
    %2240 = vmatprep.subr.bf16.mxu0 %v1618
    %2241 = vmatpush1.bf16.msra.mxu0 %v1617
    %2242 = vmatprep.subr.bf16.mxu0 %v1626
    %2243 = vmatpush1.bf16.msra.mxu0 %v1625
    %2244 = vmatprep.subr.bf16.mxu0 %v1634
    %2245 = vmatpush1.bf16.msra.mxu0 %v1633
    %2246 = vmatprep.subr.bf16.mxu0 %v1642
    %2247 = vmatpush1.bf16.msra.mxu0 %v1641
    %2248 = vmatprep.subr.bf16.mxu0 %v1650
    %2249 = vmatpush1.bf16.msra.mxu0 %v1649
    %2250 = vmatprep.subr.bf16.mxu0 %v1658
    %2251 = vmatpush1.bf16.msra.mxu0 %v1657
    %2252 = vmatprep.subr.bf16.mxu0 %v1666
    %2253 = vmatpush1.bf16.msra.mxu0 %v1665
    %2254 = vmatprep.subr.bf16.mxu0 %v1674
    %2255 = vmatpush1.bf16.msra.mxu0 %v1673
    %2256 = vmatprep.subr.bf16.mxu0 %v1682
    %2257 = vmatpush1.bf16.msra.mxu0 %v1681
    %2258 = vmatprep.mubr.bf16.mxu0 %v360
    %2259 = vmatmul.mubr.bf16.gmra.mrb[0].mxu0 %v359
    %v2260 = vpop.f32.mrb[0].mxu0
    %v2261 = vadd.f32 %v2220, %v2260
    %v2262 = vpop.f32.mrb[0].mxu0
    %v2263 = vadd.f32 %v2222, %v2262
    %v2264 = vpop.f32.mrb[0].mxu0
    %v2265 = vpop.f32.mrb[0].mxu0
    %2266 = vdwg.mxu0
    %v2267 = vxor.u32 %v2015, 2147483648
    %v2268 = vxor.u32 %v2017, 2147483648
    %v2269 = vxor.u32 %v2097, 2147483648
    %v2270 = vxor.u32 %v2099, 2147483648
    %v2271 = vxor.u32 %v2179, 2147483648
    %v2272 = vxor.u32 %v2181, 2147483648
    %v2273 = vmul.f32 %v2267, 1.442695
    %v2274 = vpow.pop %v2273
    %v2275 = vmul.f32 %v2268, 1.442695
    %v2276 = vpow.pop %v2275
    %v2277 = vmul.f32 %v2269, 1.442695
    %v2278 = vpow.pop %v2277
    %v2279 = vmul.f32 %v2270, 1.442695
    %v2280 = vpow.pop %v2279
    %v2281 = vmul.f32 %v2271, 1.442695
    %v2282 = vpow.pop %v2281
    %v2283 = vmul.f32 %v2272, 1.442695
    %v2284 = vpow.pop %v2283
    %v2285 = vadd.f32 %v2274, 1.0
    %v2286 = vadd.f32 %v2276, 1.0
    %v2287 = vadd.f32 %v2278, 1.0
    %v2288 = vadd.f32 %v2280, 1.0
    %v2289 = vadd.f32 %v2282, 1.0
    %v2290 = vadd.f32 %v2284, 1.0
    %v2291 = vrcp.pop %v2285
    %v2292 = vmul.f32 1.0, %v2291
    %v2293 = vrcp.pop %v2286
    %v2294 = vmul.f32 1.0, %v2293
    %v2295 = vrcp.pop %v2287
    %v2296 = vmul.f32 1.0, %v2295
    %v2297 = vrcp.pop %v2288
    %v2298 = vmul.f32 1.0, %v2297
    %v2299 = vrcp.pop %v2289
    %v2300 = vmul.f32 1.0, %v2299
    %v2301 = vrcp.pop %v2290
    %v2302 = vmul.f32 1.0, %v2301
    %v2303 = vtanh.pop %v2261
    %v2304 = vtanh.pop %v2263
    %v2305 = vld [vmem:[#allocation7] sm:$0xff]
    %v2306 = vld [vmem:[#allocation7 + $0x8] sm:$0xff]
    %v2307 = vmul.f32 %v2296, %v2305
    %v2308 = vmul.f32 %v2298, %v2306
    %v2309 = vmul.f32 %v2292, %v2303
    %v2310 = vmul.f32 %v2294, %v2304
    %v2311 = vadd.f32 %v2307, %v2309
    %v2312 = vadd.f32 %v2308, %v2310
    %v2313 = vtanh.pop %v2311
    %v2314 = vtanh.pop %v2312
    %v2315 = vmul.f32 %v2300, %v2313
    %v2316 = vmul.f32 %v2302, %v2314
    %v2317 = vpack.c.bf16 %v2315, %v2315
    %v2318 = vpack.c.bf16 %v2316, %v2316
    %v2319 = vld [vmem:[#allocation13] sm:$0xf]
    %v2320 = vld [vmem:[#allocation13 + $0x4] sm:$0xf]
    %v2321 = vld [vmem:[#allocation13 + $0x8] sm:$0xf]
    %v2322 = vld [vmem:[#allocation13 + $0xc] sm:$0xf]
    %v2323 = vld [vmem:[#allocation13 + $0x10] sm:$0xf]
    %v2324 = vld [vmem:[#allocation13 + $0x14] sm:$0xf]
    %v2325 = vld [vmem:[#allocation13 + $0x18] sm:$0xf]
    %v2326 = vld [vmem:[#allocation13 + $0x1c] sm:$0xf]
    %v2327 = vld [vmem:[#allocation13 + $0x20] sm:$0xf]
    %v2328 = vld [vmem:[#allocation13 + $0x24] sm:$0xf]
    %v2329 = vld [vmem:[#allocation13 + $0x28] sm:$0xf]
    %v2330 = vld [vmem:[#allocation13 + $0x2c] sm:$0xf]
    %v2331 = vld [vmem:[#allocation13 + $0x30] sm:$0xf]
    %v2332 = vld [vmem:[#allocation13 + $0x34] sm:$0xf]
    %v2333 = vld [vmem:[#allocation13 + $0x38] sm:$0xf]
    %v2334 = vld [vmem:[#allocation13 + $0x3c] sm:$0xf]
    %v2335 = vld [vmem:[#allocation13 + $0x40] sm:$0xf]
    %v2336 = vld [vmem:[#allocation13 + $0x44] sm:$0xf]
    %v2337 = vld [vmem:[#allocation13 + $0x48] sm:$0xf]
    %v2338 = vld [vmem:[#allocation13 + $0x4c] sm:$0xf]
    %v2339 = vld [vmem:[#allocation13 + $0x50] sm:$0xf]
    %v2340 = vld [vmem:[#allocation13 + $0x54] sm:$0xf]
    %v2341 = vld [vmem:[#allocation13 + $0x58] sm:$0xf]
    %v2342 = vld [vmem:[#allocation13 + $0x5c] sm:$0xf]
    %v2343 = vld [vmem:[#allocation13 + $0x60] sm:$0xf]
    %v2344 = vld [vmem:[#allocation13 + $0x64] sm:$0xf]
    %v2345 = vld [vmem:[#allocation13 + $0x68] sm:$0xf]
    %v2346 = vld [vmem:[#allocation13 + $0x6c] sm:$0xf]
    %v2347 = vld [vmem:[#allocation13 + $0x70] sm:$0xf]
    %v2348 = vld [vmem:[#allocation13 + $0x74] sm:$0xf]
    %v2349 = vld [vmem:[#allocation13 + $0x78] sm:$0xf]
    %v2350 = vld [vmem:[#allocation13 + $0x7c] sm:$0xf]
    %v2351 = vld [vmem:[%s10] sm:$0x1]
    %v2353 = vlaneseq
    %v2354 = vshrl.u32 %v2353, 7
    %v2355 = vsub.s32 0, %v2354
    %v2356 = vrot.slane %v2351, %v2355
    %v2390 = vunpack.c.l.b16 %v2319
    %v2391 = vunpack.c.l.b16 %v2320
    %v2392 = vunpack.c.l.b16 %v2321
    %v2393 = vunpack.c.l.b16 %v2322
    %v2394 = vunpack.c.l.b16 %v2323
    %v2395 = vunpack.c.l.b16 %v2324
    %v2396 = vunpack.c.l.b16 %v2325
    %v2397 = vunpack.c.l.b16 %v2326
    %v2398 = vunpack.c.l.b16 %v2327
    %v2399 = vunpack.c.l.b16 %v2328
    %v2400 = vunpack.c.l.b16 %v2329
    %v2401 = vunpack.c.l.b16 %v2330
    %v2402 = vunpack.c.l.b16 %v2331
    %v2403 = vunpack.c.l.b16 %v2332
    %v2404 = vunpack.c.l.b16 %v2333
    %v2405 = vunpack.c.l.b16 %v2334
    %v2406 = vunpack.c.l.b16 %v2335
    %v2407 = vunpack.c.l.b16 %v2336
    %v2408 = vunpack.c.l.b16 %v2337
    %v2409 = vunpack.c.l.b16 %v2338
    %v2410 = vunpack.c.l.b16 %v2339
    %v2411 = vunpack.c.l.b16 %v2340
    %v2412 = vunpack.c.l.b16 %v2341
    %v2413 = vunpack.c.l.b16 %v2342
    %v2414 = vunpack.c.l.b16 %v2343
    %v2415 = vunpack.c.l.b16 %v2344
    %v2416 = vunpack.c.l.b16 %v2345
    %v2417 = vunpack.c.l.b16 %v2346
    %v2418 = vunpack.c.l.b16 %v2347
    %v2419 = vunpack.c.l.b16 %v2348
    %v2420 = vunpack.c.l.b16 %v2349
    %v2421 = vunpack.c.l.b16 %v2350
    %v2422 = vpack.c.b16 %v2391, %v2390
    %v2423 = vpack.c.b16 %v2393, %v2392
    %v2424 = vpack.c.b16 %v2395, %v2394
    %v2425 = vpack.c.b16 %v2397, %v2396
    %v2426 = vpack.c.b16 %v2399, %v2398
    %v2427 = vpack.c.b16 %v2401, %v2400
    %v2428 = vpack.c.b16 %v2403, %v2402
    %v2429 = vpack.c.b16 %v2405, %v2404
    %v2430 = vpack.c.b16 %v2407, %v2406
    %v2431 = vpack.c.b16 %v2409, %v2408
    %v2432 = vpack.c.b16 %v2411, %v2410
    %v2433 = vpack.c.b16 %v2413, %v2412
    %v2434 = vpack.c.b16 %v2415, %v2414
    %v2435 = vpack.c.b16 %v2417, %v2416
    %v2436 = vpack.c.b16 %v2419, %v2418
    %v2437 = vpack.c.b16 %v2421, %v2420
    %2454 = vmatprep.subr.bf16.mxu0 0
    %2455 = vmatpush1.bf16.msra.mxu0 %v2422
    %2456 = vmatprep.subr.bf16.mxu0 0
    %2457 = vmatpush1.bf16.msra.mxu0 %v2423
    %2458 = vmatprep.subr.bf16.mxu0 0
    %2459 = vmatpush1.bf16.msra.mxu0 %v2424
    %2460 = vmatprep.subr.bf16.mxu0 0
    %2461 = vmatpush1.bf16.msra.mxu0 %v2425
    %2462 = vmatprep.subr.bf16.mxu0 0
    %2463 = vmatpush1.bf16.msra.mxu0 %v2426
    %2464 = vmatprep.subr.bf16.mxu0 0
    %2465 = vmatpush1.bf16.msra.mxu0 %v2427
    %2466 = vmatprep.subr.bf16.mxu0 0
    %2467 = vmatpush1.bf16.msra.mxu0 %v2428
    %2468 = vmatprep.subr.bf16.mxu0 0
    %2469 = vmatpush1.bf16.msra.mxu0 %v2429
    %2470 = vmatprep.subr.bf16.mxu0 0
    %2471 = vmatpush1.bf16.msra.mxu0 %v2430
    %2472 = vmatprep.subr.bf16.mxu0 0
    %2473 = vmatpush1.bf16.msra.mxu0 %v2431
    %2474 = vmatprep.subr.bf16.mxu0 0
    %2475 = vmatpush1.bf16.msra.mxu0 %v2432
    %2476 = vmatprep.subr.bf16.mxu0 0
    %2477 = vmatpush1.bf16.msra.mxu0 %v2433
    %2478 = vmatprep.subr.bf16.mxu0 0
    %2479 = vmatpush1.bf16.msra.mxu0 %v2434
    %2480 = vmatprep.subr.bf16.mxu0 0
    %2481 = vmatpush1.bf16.msra.mxu0 %v2435
    %2482 = vmatprep.subr.bf16.mxu0 0
    %2483 = vmatpush1.bf16.msra.mxu0 %v2436
    %2484 = vmatprep.subr.bf16.mxu0 0
    %2485 = vmatpush1.bf16.msra.mxu0 %v2437
    %2486 = vmatprep.mubr.bf16.mxu0 %v2318
    %2487 = vmatmul.mubr.bf16.gmra.mrb[0].mxu0 %v2317
    %v2488 = vpop.f32.mrb[0].mxu0
    %v2489 = vadd.f32 %v2356, %v2488
    %v2490 = vpop.f32.mrb[0].mxu0
    %v2491 = vpop.f32.mrb[0].mxu0
    %v2492 = vpop.f32.mrb[0].mxu0
    %2493 = vdwg.mxu0
    %2494 = vst [vmem:[#allocation14] sm:$0xff] %v2489
    %2495 = vst [vmem:[#allocation15] sm:$0xff] %v2315
    %2496 = vst [vmem:[#allocation15 + $0x8] sm:$0xff] %v2316
    %2497 = vst [vmem:[#allocation17] sm:$0xff] %v2311
    %2498 = vst [vmem:[#allocation17 + $0x8] sm:$0xff] %v2312
    // Predicated region
    $region74: #{tpu_custom_call.1} parent=1 // pred_check
      _
    $region75: #{tpu_custom_call.1} parent=1 // pred_check_branch
      %2500 = sbr.rel (0) target = $region77
    $region76: #{tpu_custom_call.1} parent=1 // pred_region
      %s2502 = ssub.s32 128, 128
      %2503 = vsyncadd [#allocation4], %s2502
      %s2505 = sshll.u32 [#allocation14], 4
      %s2506 = int_to_ptr.vmem [resolvable:$true] %s2505
      %2508 = dma.vmem_to_hbm [thread:$0]  %s2506, 128, %s11, [#allocation4]
    $region77: #{tpu_custom_call.1} parent=1 // pred_fallthru
      _
    // Predicated region
    $region78: #{tpu_custom_call.1} parent=1 // pred_check
      _
    $region79: #{tpu_custom_call.1} parent=1 // pred_check_branch
      %2510 = sbr.rel (0) target = $region81
    $region80: #{tpu_custom_call.1} parent=1 // pred_region
      %s2512 = ssub.s32 256, 256
      %2513 = vsyncadd [#allocation16], %s2512
      %s2515 = sshll.u32 [#allocation15], 4
      %s2516 = int_to_ptr.vmem [resolvable:$true] %s2515
      %2518 = dma.vmem_to_hbm [thread:$0]  %s2516, 256, %s12, [#allocation16]
    $region81: #{tpu_custom_call.1} parent=1 // pred_fallthru
      _
    // Predicated region
    $region82: #{tpu_custom_call.1} parent=1 // pred_check
      _
    $region83: #{tpu_custom_call.1} parent=1 // pred_check_branch
      %2520 = sbr.rel (0) target = $region85
    $region84: #{tpu_custom_call.1} parent=1 // pred_region
      %s2522 = ssub.s32 256, 256
      %2523 = vsyncadd [#allocation16], %s2522
      %s2525 = sshll.u32 [#allocation17], 4
      %s2526 = int_to_ptr.vmem [resolvable:$true] %s2525
      %2528 = dma.vmem_to_hbm [thread:$0]  %s2526, 256, %s13, [#allocation16]
    $region85: #{tpu_custom_call.1} parent=1 // pred_fallthru
      _
    // Predicated region
    $region86: #{tpu_custom_call.1} parent=1 // pred_check
      _
    $region87: #{tpu_custom_call.1} parent=1 // pred_check_branch
      %2530 = sbr.rel (0) target = $region89
    $region88: #{tpu_custom_call.1} parent=1 // pred_region
      %2531 = dma.done [#allocation4], 128
    $region89: #{tpu_custom_call.1} parent=1 // pred_fallthru
      _
    // Predicated region
    $region90: #{tpu_custom_call.1} parent=1 // pred_check
      _
    $region91: #{tpu_custom_call.1} parent=1 // pred_check_branch
      %2533 = sbr.rel (0) target = $region93
    $region92: #{tpu_custom_call.1} parent=1 // pred_region
      %2534 = dma.done [#allocation16], 256
    $region93: #{tpu_custom_call.1} parent=1 // pred_fallthru
      _
    // Predicated region
    $region94: #{tpu_custom_call.1} parent=1 // pred_check
      _
    $region95: #{tpu_custom_call.1} parent=1 // pred_check_branch
      %2536 = sbr.rel (0) target = $region97
    $region96: #{tpu_custom_call.1} parent=1 // pred_region
      %2537 = dma.done [#allocation16], 256
    $region97: #{tpu_custom_call.1} parent=1 // pred_fallthru
      _
    %2538 = vsyncpa [#allocation3], 1
    %2539 = vsyncpa [#allocation6], 1
    %2540 = vsyncpa [#allocation9], 1
    %2541 = vsyncpa [#allocation12], 1
    %2542 = vsyncpa [#allocation4], 1
    %2543 = vsyncpa [#allocation16], 1

</llo_original>
